<compile_context>
chip_gen: v7x
topology: tpu7x:2x2x1
jax: 0.10.0
libtpu: 0.0.40
codegen_flags: <defaults>
</compile_context>

<pallas_src>
import functools

import jax
import jax.numpy as jnp
from jax.experimental import pallas as pl
from jax.experimental.pallas import tpu as pltpu


def _multinomial_kernel(f_ref, u_ref, nodes_ref, out_ref, *,
                        k, k_pad, chunk, n_chunks):
    K = f_ref.shape[1]
    lane_i = jax.lax.broadcasted_iota(jnp.int32, (1, K), 1)

    # --- normalize inclusion scores ---------------------------------------
    f = f_ref[...].astype(jnp.float32)                      # (1, K)
    p = f / jnp.sum(f, axis=-1, keepdims=True)              # probs, (1, K)

    # --- inclusive CDF via Hillis-Steele prefix sum over lanes -------------
    cdf = p
    s = 1
    while s < K:                                            # log2(K) steps
        shifted = jnp.concatenate(
            [jnp.zeros((1, s), jnp.float32), cdf[:, :K - s]], axis=1)
        cdf = cdf + shifted
        s *= 2
    # clamp last bucket so every u in [0, 1) lands somewhere despite fp drift
    cdf = jnp.where(lane_i == K - 1, jnp.float32(1.0), cdf)

    # --- chunked multinomial counting --------------------------------------
    # C[j] = #(draws with u < cdf[j]); per-category counts = C[j] - C[j-1].
    def chunk_body(c, acc):
        u = u_ref[pl.ds(c * chunk, chunk), :]               # (chunk, 1)
        lt = (u < cdf).astype(jnp.int32)                    # (chunk, K)
        return acc + jnp.sum(lt, axis=0, keepdims=True)     # (1, K)

    cum = jax.lax.fori_loop(0, n_chunks, chunk_body,
                            jnp.zeros((1, K), jnp.int32), unroll=True)
    cum_prev = jnp.concatenate(
        [jnp.zeros((1, 1), jnp.int32), cum[:, :K - 1]], axis=1)
    counts = cum - cum_prev                                  # (1, K) int32

    # --- top-k (argmax, ties -> smallest index), one-hot rows in registers --
    row_i = jax.lax.broadcasted_iota(jnp.int32, (k_pad, 1), 0)

    def topk_body(t, carry):
        cts, oh_acc = carry
        m = jnp.max(cts, axis=-1, keepdims=True)             # (1, 1)
        cand = jnp.where(cts == m, lane_i, K)
        idx = jnp.min(cand, axis=-1, keepdims=True)          # first max index
        sel = lane_i == idx                                   # (1, K) bool
        oh_acc = jnp.where(row_i == t, sel.astype(jnp.float32), oh_acc)
        cts = jnp.where(sel, jnp.int32(-1), cts)
        return cts, oh_acc

    _, onehot = jax.lax.fori_loop(
        0, k, topk_body,
        (counts, jnp.zeros((k_pad, K), jnp.float32)), unroll=True)

    # --- single batched one-hot gather + one dense store --------------------
    # HIGHEST keeps 1.0 * x exact (one-hot gather reproduces node rows bitwise).
    gathered = jnp.dot(onehot, nodes_ref[...].astype(jnp.float32),
                       preferred_element_type=jnp.float32,
                       precision=jax.lax.Precision.HIGHEST)   # (k_pad, D)
    out_ref[...] = gathered.astype(out_ref.dtype)


def multinomial_layer(f, nodes, target_number_points, key=None):
    """JAX/Pallas equivalent of MultinomialLayer.forward(f, k, nodes)."""
    K = int(f.shape[0])
    D = int(nodes.shape[1])
    k = int(target_number_points)
    total_count = 10 * K                       # torch: 10 * probs.shape[0]

    chunk = 256
    n_pad = pl.cdiv(total_count, chunk) * chunk
    n_chunks = n_pad // chunk
    k_pad = ((k + 7) // 8) * 8                 # pad output rows to 8 sublanes

    if key is None:
        key = jax.random.PRNGKey(0)
    u = jax.random.uniform(key, (total_count, 1), jnp.float32)   # [0, 1)
    if n_pad > total_count:                    # padded draws never counted
        u = jnp.concatenate(
            [u, jnp.full((n_pad - total_count, 1), 2.0, jnp.float32)], axis=0)

    f2 = f.reshape(1, K).astype(jnp.float32)
    nodes2 = nodes.astype(jnp.float32)

    # scoped-VMEM budget from actual operands (nodes + lane-padded u + out), 2x
    # for pipeline buffering plus headroom, clamped to [16 MiB, 64 MiB].
    vmem_bytes = 2 * 4 * (K * D + n_pad * 128 + k_pad * D + 4 * K) + (4 << 20)
    vmem_limit = int(min(max(vmem_bytes, 16 << 20), 64 << 20))

    kernel = functools.partial(_multinomial_kernel, k=k, k_pad=k_pad,
                               chunk=chunk, n_chunks=n_chunks)
    out_pad = pl.pallas_call(
        kernel,
        out_shape=jax.ShapeDtypeStruct((k_pad, D), jnp.float32),
        grid=(1,),
        in_specs=[
            pl.BlockSpec((1, K), lambda i: (0, 0)),
            pl.BlockSpec((n_pad, 1), lambda i: (0, 0)),
            pl.BlockSpec((K, D), lambda i: (0, 0)),
        ],
        out_specs=pl.BlockSpec((k_pad, D), lambda i: (0, 0)),
        compiler_params=pltpu.CompilerParams(
            dimension_semantics=("arbitrary",),
            vmem_limit_bytes=vmem_limit),
    )(f2, u, nodes2)
    return out_pad[:k]


if __name__ == "__main__":
    key = jax.random.PRNGKey(0)
    kf, kn, ku = jax.random.split(key, 3)

    K, D = 128, 128            # number of candidate nodes, feature dim
    k = 8                      # target_number_points

    f = jax.random.uniform(kf, (K,), jnp.float32, minval=0.1, maxval=1.0)
    nodes = jax.random.normal(kn, (K, D), jnp.float32)

    out = multinomial_layer(f, nodes, k, key=ku)
    out = jax.block_until_ready(out)

    assert out.shape == (k, D), out.shape
    # every output row must be (exactly) one of the node rows, all distinct
    diffs = jnp.max(jnp.abs(out[:, None, :] - nodes[None, :, :]), axis=-1)  # (k, K)
    min_diff = jnp.min(diffs, axis=-1)
    match_idx = jnp.argmin(diffs, axis=-1)
    assert bool(jnp.all(min_diff < 1e-5)), min_diff
    assert len(set(int(i) for i in match_idx)) == k, match_idx

    print("KERNEL_OK")
</pallas_src>

<mosaic_0001>
module attributes {stable_mosaic.version = 11 : i64} {
  func.func @_multinomial_kernel(%arg0: i32, %arg1: memref<1x128xf32, #tpu.memory_space<vmem>>, %arg2: memref<1280x1xf32, #tpu.memory_space<vmem>>, %arg3: memref<128x128xf32, #tpu.memory_space<vmem>>, %arg4: memref<8x128xf32, #tpu.memory_space<vmem>>) attributes {dimension_semantics = [#tpu.dimension_semantics<arbitrary>], iteration_bounds = array<i64: 1>, scalar_prefetch = 0 : i64, scratch_operands = 0 : i64, tpu.core_type = #tpu.core_type<tc>, window_params = [{pipeline_mode = #tpu.pipeline_mode<synchronous>, transform_indices = @transform_0, window_bounds = array<i64: 1, 128>}, {pipeline_mode = #tpu.pipeline_mode<synchronous>, transform_indices = @transform_1, window_bounds = array<i64: 1280, 1>}, {pipeline_mode = #tpu.pipeline_mode<synchronous>, transform_indices = @transform_2, window_bounds = array<i64: 128, 128>}, {pipeline_mode = #tpu.pipeline_mode<synchronous>, transform_indices = @transform_3, window_bounds = array<i64: 8, 128>}]} {
    %0 = tpu.iota {dimensions = array<i32: 1>} : vector<1x128xi32>
    %c0 = arith.constant 0 : index
    %c0_0 = arith.constant 0 : index
    %1 = vector.load %arg1[%c0, %c0_0] : memref<1x128xf32, #tpu.memory_space<vmem>>, vector<1x128xf32>
    %cst = arith.constant dense<0.000000e+00> : vector<1xf32>
    %2 = vector.multi_reduction <add>, %1, %cst [1] : vector<1x128xf32> to vector<1xf32>
    %3 = vector.shape_cast %2 : vector<1xf32> to vector<1x1xf32>
    %4 = vector.broadcast %3 : vector<1x1xf32> to vector<1x128xf32>
    %5 = arith.divf %1, %4 : vector<1x128xf32>
    %cst_1 = arith.constant 0.000000e+00 : f32
    %6 = vector.broadcast %cst_1 : f32 to vector<1x1xf32>
    %7 = vector.extract_strided_slice %5 {offsets = [0, 0], sizes = [1, 127], strides = [1, 1]} : vector<1x128xf32> to vector<1x127xf32>
    %8 = tpu.concatenate %6, %7 in 1 : vector<1x1xf32>, vector<1x127xf32> -> vector<1x128xf32>
    %9 = arith.addf %5, %8 : vector<1x128xf32>
    %cst_2 = arith.constant 0.000000e+00 : f32
    %10 = vector.broadcast %cst_2 : f32 to vector<1x2xf32>
    %11 = vector.extract_strided_slice %9 {offsets = [0, 0], sizes = [1, 126], strides = [1, 1]} : vector<1x128xf32> to vector<1x126xf32>
    %12 = tpu.concatenate %10, %11 in 1 : vector<1x2xf32>, vector<1x126xf32> -> vector<1x128xf32>
    %13 = arith.addf %9, %12 : vector<1x128xf32>
    %cst_3 = arith.constant 0.000000e+00 : f32
    %14 = vector.broadcast %cst_3 : f32 to vector<1x4xf32>
    %15 = vector.extract_strided_slice %13 {offsets = [0, 0], sizes = [1, 124], strides = [1, 1]} : vector<1x128xf32> to vector<1x124xf32>
    %16 = tpu.concatenate %14, %15 in 1 : vector<1x4xf32>, vector<1x124xf32> -> vector<1x128xf32>
    %17 = arith.addf %13, %16 : vector<1x128xf32>
    %cst_4 = arith.constant 0.000000e+00 : f32
    %18 = vector.broadcast %cst_4 : f32 to vector<1x8xf32>
    %19 = vector.extract_strided_slice %17 {offsets = [0, 0], sizes = [1, 120], strides = [1, 1]} : vector<1x128xf32> to vector<1x120xf32>
    %20 = tpu.concatenate %18, %19 in 1 : vector<1x8xf32>, vector<1x120xf32> -> vector<1x128xf32>
    %21 = arith.addf %17, %20 : vector<1x128xf32>
    %cst_5 = arith.constant 0.000000e+00 : f32
    %22 = vector.broadcast %cst_5 : f32 to vector<1x16xf32>
    %23 = vector.extract_strided_slice %21 {offsets = [0, 0], sizes = [1, 112], strides = [1, 1]} : vector<1x128xf32> to vector<1x112xf32>
    %24 = tpu.concatenate %22, %23 in 1 : vector<1x16xf32>, vector<1x112xf32> -> vector<1x128xf32>
    %25 = arith.addf %21, %24 : vector<1x128xf32>
    %cst_6 = arith.constant 0.000000e+00 : f32
    %26 = vector.broadcast %cst_6 : f32 to vector<1x32xf32>
    %27 = vector.extract_strided_slice %25 {offsets = [0, 0], sizes = [1, 96], strides = [1, 1]} : vector<1x128xf32> to vector<1x96xf32>
    %28 = tpu.concatenate %26, %27 in 1 : vector<1x32xf32>, vector<1x96xf32> -> vector<1x128xf32>
    %29 = arith.addf %25, %28 : vector<1x128xf32>
    %cst_7 = arith.constant 0.000000e+00 : f32
    %30 = vector.broadcast %cst_7 : f32 to vector<1x64xf32>
    %31 = vector.extract_strided_slice %29 {offsets = [0, 0], sizes = [1, 64], strides = [1, 1]} : vector<1x128xf32> to vector<1x64xf32>
    %32 = tpu.concatenate %30, %31 in 1 : vector<1x64xf32>, vector<1x64xf32> -> vector<1x128xf32>
    %33 = arith.addf %29, %32 : vector<1x128xf32>
    %c127_i32 = arith.constant 127 : i32
    %34 = vector.broadcast %c127_i32 : i32 to vector<1x128xi32>
    %35 = arith.cmpi eq, %0, %34 : vector<1x128xi32>
    %cst_8 = arith.constant 1.000000e+00 : f32
    %36 = vector.broadcast %cst_8 : f32 to vector<1x128xf32>
    %37 = arith.select %35, %36, %33 : vector<1x128xi1>, vector<1x128xf32>
    %c0_i32 = arith.constant 0 : i32
    %38 = vector.broadcast %c0_i32 : i32 to vector<1x128xi32>
    %c0_i32_9 = arith.constant 0 : i32
    %c256_i32 = arith.constant 256 : i32
    %39 = arith.muli %c0_i32_9, %c256_i32 : i32
    %40 = arith.index_cast %39 : i32 to index
    %c0_10 = arith.constant 0 : index
    %41 = vector.load %arg2[%40, %c0_10] : memref<1280x1xf32, #tpu.memory_space<vmem>>, vector<256x1xf32>
    %42 = vector.broadcast %41 : vector<256x1xf32> to vector<256x128xf32>
    %43 = vector.broadcast %37 : vector<1x128xf32> to vector<256x128xf32>
    %44 = arith.cmpf olt, %42, %43 : vector<256x128xf32>
    %45 = arith.extui %44 : vector<256x128xi1> to vector<256x128xi32>
    %cst_11 = arith.constant dense<0> : vector<128xi32>
    %46 = vector.multi_reduction <add>, %45, %cst_11 [0] : vector<256x128xi32> to vector<128xi32>
    %47 = vector.shape_cast %46 : vector<128xi32> to vector<1x128xi32>
    %48 = arith.addi %38, %47 : vector<1x128xi32>
    %c1_i32 = arith.constant 1 : i32
    %c256_i32_12 = arith.constant 256 : i32
    %49 = arith.muli %c1_i32, %c256_i32_12 : i32
    %50 = arith.index_cast %49 : i32 to index
    %c0_13 = arith.constant 0 : index
    %51 = vector.load %arg2[%50, %c0_13] : memref<1280x1xf32, #tpu.memory_space<vmem>>, vector<256x1xf32>
    %52 = vector.broadcast %51 : vector<256x1xf32> to vector<256x128xf32>
    %53 = vector.broadcast %37 : vector<1x128xf32> to vector<256x128xf32>
    %54 = arith.cmpf olt, %52, %53 : vector<256x128xf32>
    %55 = arith.extui %54 : vector<256x128xi1> to vector<256x128xi32>
    %cst_14 = arith.constant dense<0> : vector<128xi32>
    %56 = vector.multi_reduction <add>, %55, %cst_14 [0] : vector<256x128xi32> to vector<128xi32>
    %57 = vector.shape_cast %56 : vector<128xi32> to vector<1x128xi32>
    %58 = arith.addi %48, %57 : vector<1x128xi32>
    %c2_i32 = arith.constant 2 : i32
    %c256_i32_15 = arith.constant 256 : i32
    %59 = arith.muli %c2_i32, %c256_i32_15 : i32
    %60 = arith.index_cast %59 : i32 to index
    %c0_16 = arith.constant 0 : index
    %61 = vector.load %arg2[%60, %c0_16] : memref<1280x1xf32, #tpu.memory_space<vmem>>, vector<256x1xf32>
    %62 = vector.broadcast %61 : vector<256x1xf32> to vector<256x128xf32>
    %63 = vector.broadcast %37 : vector<1x128xf32> to vector<256x128xf32>
    %64 = arith.cmpf olt, %62, %63 : vector<256x128xf32>
    %65 = arith.extui %64 : vector<256x128xi1> to vector<256x128xi32>
    %cst_17 = arith.constant dense<0> : vector<128xi32>
    %66 = vector.multi_reduction <add>, %65, %cst_17 [0] : vector<256x128xi32> to vector<128xi32>
    %67 = vector.shape_cast %66 : vector<128xi32> to vector<1x128xi32>
    %68 = arith.addi %58, %67 : vector<1x128xi32>
    %c3_i32 = arith.constant 3 : i32
    %c256_i32_18 = arith.constant 256 : i32
    %69 = arith.muli %c3_i32, %c256_i32_18 : i32
    %70 = arith.index_cast %69 : i32 to index
    %c0_19 = arith.constant 0 : index
    %71 = vector.load %arg2[%70, %c0_19] : memref<1280x1xf32, #tpu.memory_space<vmem>>, vector<256x1xf32>
    %72 = vector.broadcast %71 : vector<256x1xf32> to vector<256x128xf32>
    %73 = vector.broadcast %37 : vector<1x128xf32> to vector<256x128xf32>
    %74 = arith.cmpf olt, %72, %73 : vector<256x128xf32>
    %75 = arith.extui %74 : vector<256x128xi1> to vector<256x128xi32>
    %cst_20 = arith.constant dense<0> : vector<128xi32>
    %76 = vector.multi_reduction <add>, %75, %cst_20 [0] : vector<256x128xi32> to vector<128xi32>
    %77 = vector.shape_cast %76 : vector<128xi32> to vector<1x128xi32>
    %78 = arith.addi %68, %77 : vector<1x128xi32>
    %c4_i32 = arith.constant 4 : i32
    %c256_i32_21 = arith.constant 256 : i32
    %79 = arith.muli %c4_i32, %c256_i32_21 : i32
    %80 = arith.index_cast %79 : i32 to index
    %c0_22 = arith.constant 0 : index
    %81 = vector.load %arg2[%80, %c0_22] : memref<1280x1xf32, #tpu.memory_space<vmem>>, vector<256x1xf32>
    %82 = vector.broadcast %81 : vector<256x1xf32> to vector<256x128xf32>
    %83 = vector.broadcast %37 : vector<1x128xf32> to vector<256x128xf32>
    %84 = arith.cmpf olt, %82, %83 : vector<256x128xf32>
    %85 = arith.extui %84 : vector<256x128xi1> to vector<256x128xi32>
    %cst_23 = arith.constant dense<0> : vector<128xi32>
    %86 = vector.multi_reduction <add>, %85, %cst_23 [0] : vector<256x128xi32> to vector<128xi32>
    %87 = vector.shape_cast %86 : vector<128xi32> to vector<1x128xi32>
    %88 = arith.addi %78, %87 : vector<1x128xi32>
    %c5_i32 = arith.constant 5 : i32
    %c0_i32_24 = arith.constant 0 : i32
    %89 = vector.broadcast %c0_i32_24 : i32 to vector<1x1xi32>
    %90 = vector.extract_strided_slice %88 {offsets = [0, 0], sizes = [1, 127], strides = [1, 1]} : vector<1x128xi32> to vector<1x127xi32>
    %91 = tpu.concatenate %89, %90 in 1 : vector<1x1xi32>, vector<1x127xi32> -> vector<1x128xi32>
    %92 = arith.subi %88, %91 : vector<1x128xi32>
    %93 = tpu.iota {dimensions = array<i32: 0>} : vector<8x1xi32>
    %cst_25 = arith.constant 0.000000e+00 : f32
    %94 = vector.broadcast %cst_25 : f32 to vector<8x128xf32>
    %c0_i32_26 = arith.constant 0 : i32
    %cst_27 = arith.constant dense<-2147483648> : vector<1xi32>
    %95 = vector.multi_reduction <maxsi>, %92, %cst_27 [1] : vector<1x128xi32> to vector<1xi32>
    %96 = vector.shape_cast %95 : vector<1xi32> to vector<1x1xi32>
    %97 = vector.broadcast %96 : vector<1x1xi32> to vector<1x128xi32>
    %98 = arith.cmpi eq, %92, %97 : vector<1x128xi32>
    %c128_i32 = arith.constant 128 : i32
    %99 = vector.broadcast %c128_i32 : i32 to vector<1x128xi32>
    %100 = arith.select %98, %0, %99 : vector<1x128xi1>, vector<1x128xi32>
    %cst_28 = arith.constant dense<2147483647> : vector<1xi32>
    %101 = vector.multi_reduction <minsi>, %100, %cst_28 [1] : vector<1x128xi32> to vector<1xi32>
    %102 = vector.shape_cast %101 : vector<1xi32> to vector<1x1xi32>
    %103 = vector.broadcast %102 : vector<1x1xi32> to vector<1x128xi32>
    %104 = arith.cmpi eq, %0, %103 : vector<1x128xi32>
    %105 = vector.broadcast %c0_i32_26 : i32 to vector<8x1xi32>
    %106 = arith.cmpi eq, %93, %105 : vector<8x1xi32>
    %107 = arith.extui %104 : vector<1x128xi1> to vector<1x128xi32>
    %108 = arith.sitofp %107 : vector<1x128xi32> to vector<1x128xf32>
    %109 = vector.shape_cast %106 : vector<8x1xi1> to vector<8x1xi1>
    %110 = vector.broadcast %109 : vector<8x1xi1> to vector<8x128xi1>
    %111 = vector.shape_cast %108 : vector<1x128xf32> to vector<1x128xf32>
    %112 = vector.broadcast %111 : vector<1x128xf32> to vector<8x128xf32>
    %113 = arith.select %110, %112, %94 : vector<8x128xi1>, vector<8x128xf32>
    %c-1_i32 = arith.constant -1 : i32
    %114 = vector.broadcast %c-1_i32 : i32 to vector<1x128xi32>
    %115 = arith.select %104, %114, %92 : vector<1x128xi1>, vector<1x128xi32>
    %c1_i32_29 = arith.constant 1 : i32
    %cst_30 = arith.constant dense<-2147483648> : vector<1xi32>
    %116 = vector.multi_reduction <maxsi>, %115, %cst_30 [1] : vector<1x128xi32> to vector<1xi32>
    %117 = vector.shape_cast %116 : vector<1xi32> to vector<1x1xi32>
    %118 = vector.broadcast %117 : vector<1x1xi32> to vector<1x128xi32>
    %119 = arith.cmpi eq, %115, %118 : vector<1x128xi32>
    %c128_i32_31 = arith.constant 128 : i32
    %120 = vector.broadcast %c128_i32_31 : i32 to vector<1x128xi32>
    %121 = arith.select %119, %0, %120 : vector<1x128xi1>, vector<1x128xi32>
    %cst_32 = arith.constant dense<2147483647> : vector<1xi32>
    %122 = vector.multi_reduction <minsi>, %121, %cst_32 [1] : vector<1x128xi32> to vector<1xi32>
    %123 = vector.shape_cast %122 : vector<1xi32> to vector<1x1xi32>
    %124 = vector.broadcast %123 : vector<1x1xi32> to vector<1x128xi32>
    %125 = arith.cmpi eq, %0, %124 : vector<1x128xi32>
    %126 = vector.broadcast %c1_i32_29 : i32 to vector<8x1xi32>
    %127 = arith.cmpi eq, %93, %126 : vector<8x1xi32>
    %128 = arith.extui %125 : vector<1x128xi1> to vector<1x128xi32>
    %129 = arith.sitofp %128 : vector<1x128xi32> to vector<1x128xf32>
    %130 = vector.shape_cast %127 : vector<8x1xi1> to vector<8x1xi1>
    %131 = vector.broadcast %130 : vector<8x1xi1> to vector<8x128xi1>
    %132 = vector.shape_cast %129 : vector<1x128xf32> to vector<1x128xf32>
    %133 = vector.broadcast %132 : vector<1x128xf32> to vector<8x128xf32>
    %134 = arith.select %131, %133, %113 : vector<8x128xi1>, vector<8x128xf32>
    %c-1_i32_33 = arith.constant -1 : i32
    %135 = vector.broadcast %c-1_i32_33 : i32 to vector<1x128xi32>
    %136 = arith.select %125, %135, %115 : vector<1x128xi1>, vector<1x128xi32>
    %c2_i32_34 = arith.constant 2 : i32
    %cst_35 = arith.constant dense<-2147483648> : vector<1xi32>
    %137 = vector.multi_reduction <maxsi>, %136, %cst_35 [1] : vector<1x128xi32> to vector<1xi32>
    %138 = vector.shape_cast %137 : vector<1xi32> to vector<1x1xi32>
    %139 = vector.broadcast %138 : vector<1x1xi32> to vector<1x128xi32>
    %140 = arith.cmpi eq, %136, %139 : vector<1x128xi32>
    %c128_i32_36 = arith.constant 128 : i32
    %141 = vector.broadcast %c128_i32_36 : i32 to vector<1x128xi32>
    %142 = arith.select %140, %0, %141 : vector<1x128xi1>, vector<1x128xi32>
    %cst_37 = arith.constant dense<2147483647> : vector<1xi32>
    %143 = vector.multi_reduction <minsi>, %142, %cst_37 [1] : vector<1x128xi32> to vector<1xi32>
    %144 = vector.shape_cast %143 : vector<1xi32> to vector<1x1xi32>
    %145 = vector.broadcast %144 : vector<1x1xi32> to vector<1x128xi32>
    %146 = arith.cmpi eq, %0, %145 : vector<1x128xi32>
    %147 = vector.broadcast %c2_i32_34 : i32 to vector<8x1xi32>
    %148 = arith.cmpi eq, %93, %147 : vector<8x1xi32>
    %149 = arith.extui %146 : vector<1x128xi1> to vector<1x128xi32>
    %150 = arith.sitofp %149 : vector<1x128xi32> to vector<1x128xf32>
    %151 = vector.shape_cast %148 : vector<8x1xi1> to vector<8x1xi1>
    %152 = vector.broadcast %151 : vector<8x1xi1> to vector<8x128xi1>
    %153 = vector.shape_cast %150 : vector<1x128xf32> to vector<1x128xf32>
    %154 = vector.broadcast %153 : vector<1x128xf32> to vector<8x128xf32>
    %155 = arith.select %152, %154, %134 : vector<8x128xi1>, vector<8x128xf32>
    %c-1_i32_38 = arith.constant -1 : i32
    %156 = vector.broadcast %c-1_i32_38 : i32 to vector<1x128xi32>
    %157 = arith.select %146, %156, %136 : vector<1x128xi1>, vector<1x128xi32>
    %c3_i32_39 = arith.constant 3 : i32
    %cst_40 = arith.constant dense<-2147483648> : vector<1xi32>
    %158 = vector.multi_reduction <maxsi>, %157, %cst_40 [1] : vector<1x128xi32> to vector<1xi32>
    %159 = vector.shape_cast %158 : vector<1xi32> to vector<1x1xi32>
    %160 = vector.broadcast %159 : vector<1x1xi32> to vector<1x128xi32>
    %161 = arith.cmpi eq, %157, %160 : vector<1x128xi32>
    %c128_i32_41 = arith.constant 128 : i32
    %162 = vector.broadcast %c128_i32_41 : i32 to vector<1x128xi32>
    %163 = arith.select %161, %0, %162 : vector<1x128xi1>, vector<1x128xi32>
    %cst_42 = arith.constant dense<2147483647> : vector<1xi32>
    %164 = vector.multi_reduction <minsi>, %163, %cst_42 [1] : vector<1x128xi32> to vector<1xi32>
    %165 = vector.shape_cast %164 : vector<1xi32> to vector<1x1xi32>
    %166 = vector.broadcast %165 : vector<1x1xi32> to vector<1x128xi32>
    %167 = arith.cmpi eq, %0, %166 : vector<1x128xi32>
    %168 = vector.broadcast %c3_i32_39 : i32 to vector<8x1xi32>
    %169 = arith.cmpi eq, %93, %168 : vector<8x1xi32>
    %170 = arith.extui %167 : vector<1x128xi1> to vector<1x128xi32>
    %171 = arith.sitofp %170 : vector<1x128xi32> to vector<1x128xf32>
    %172 = vector.shape_cast %169 : vector<8x1xi1> to vector<8x1xi1>
    %173 = vector.broadcast %172 : vector<8x1xi1> to vector<8x128xi1>
    %174 = vector.shape_cast %171 : vector<1x128xf32> to vector<1x128xf32>
    %175 = vector.broadcast %174 : vector<1x128xf32> to vector<8x128xf32>
    %176 = arith.select %173, %175, %155 : vector<8x128xi1>, vector<8x128xf32>
    %c-1_i32_43 = arith.constant -1 : i32
    %177 = vector.broadcast %c-1_i32_43 : i32 to vector<1x128xi32>
    %178 = arith.select %167, %177, %157 : vector<1x128xi1>, vector<1x128xi32>
    %c4_i32_44 = arith.constant 4 : i32
    %cst_45 = arith.constant dense<-2147483648> : vector<1xi32>
    %179 = vector.multi_reduction <maxsi>, %178, %cst_45 [1] : vector<1x128xi32> to vector<1xi32>
    %180 = vector.shape_cast %179 : vector<1xi32> to vector<1x1xi32>
    %181 = vector.broadcast %180 : vector<1x1xi32> to vector<1x128xi32>
    %182 = arith.cmpi eq, %178, %181 : vector<1x128xi32>
    %c128_i32_46 = arith.constant 128 : i32
    %183 = vector.broadcast %c128_i32_46 : i32 to vector<1x128xi32>
    %184 = arith.select %182, %0, %183 : vector<1x128xi1>, vector<1x128xi32>
    %cst_47 = arith.constant dense<2147483647> : vector<1xi32>
    %185 = vector.multi_reduction <minsi>, %184, %cst_47 [1] : vector<1x128xi32> to vector<1xi32>
    %186 = vector.shape_cast %185 : vector<1xi32> to vector<1x1xi32>
    %187 = vector.broadcast %186 : vector<1x1xi32> to vector<1x128xi32>
    %188 = arith.cmpi eq, %0, %187 : vector<1x128xi32>
    %189 = vector.broadcast %c4_i32_44 : i32 to vector<8x1xi32>
    %190 = arith.cmpi eq, %93, %189 : vector<8x1xi32>
    %191 = arith.extui %188 : vector<1x128xi1> to vector<1x128xi32>
    %192 = arith.sitofp %191 : vector<1x128xi32> to vector<1x128xf32>
    %193 = vector.shape_cast %190 : vector<8x1xi1> to vector<8x1xi1>
    %194 = vector.broadcast %193 : vector<8x1xi1> to vector<8x128xi1>
    %195 = vector.shape_cast %192 : vector<1x128xf32> to vector<1x128xf32>
    %196 = vector.broadcast %195 : vector<1x128xf32> to vector<8x128xf32>
    %197 = arith.select %194, %196, %176 : vector<8x128xi1>, vector<8x128xf32>
    %c-1_i32_48 = arith.constant -1 : i32
    %198 = vector.broadcast %c-1_i32_48 : i32 to vector<1x128xi32>
    %199 = arith.select %188, %198, %178 : vector<1x128xi1>, vector<1x128xi32>
    %c5_i32_49 = arith.constant 5 : i32
    %cst_50 = arith.constant dense<-2147483648> : vector<1xi32>
    %200 = vector.multi_reduction <maxsi>, %199, %cst_50 [1] : vector<1x128xi32> to vector<1xi32>
    %201 = vector.shape_cast %200 : vector<1xi32> to vector<1x1xi32>
    %202 = vector.broadcast %201 : vector<1x1xi32> to vector<1x128xi32>
    %203 = arith.cmpi eq, %199, %202 : vector<1x128xi32>
    %c128_i32_51 = arith.constant 128 : i32
    %204 = vector.broadcast %c128_i32_51 : i32 to vector<1x128xi32>
    %205 = arith.select %203, %0, %204 : vector<1x128xi1>, vector<1x128xi32>
    %cst_52 = arith.constant dense<2147483647> : vector<1xi32>
    %206 = vector.multi_reduction <minsi>, %205, %cst_52 [1] : vector<1x128xi32> to vector<1xi32>
    %207 = vector.shape_cast %206 : vector<1xi32> to vector<1x1xi32>
    %208 = vector.broadcast %207 : vector<1x1xi32> to vector<1x128xi32>
    %209 = arith.cmpi eq, %0, %208 : vector<1x128xi32>
    %210 = vector.broadcast %c5_i32_49 : i32 to vector<8x1xi32>
    %211 = arith.cmpi eq, %93, %210 : vector<8x1xi32>
    %212 = arith.extui %209 : vector<1x128xi1> to vector<1x128xi32>
    %213 = arith.sitofp %212 : vector<1x128xi32> to vector<1x128xf32>
    %214 = vector.shape_cast %211 : vector<8x1xi1> to vector<8x1xi1>
    %215 = vector.broadcast %214 : vector<8x1xi1> to vector<8x128xi1>
    %216 = vector.shape_cast %213 : vector<1x128xf32> to vector<1x128xf32>
    %217 = vector.broadcast %216 : vector<1x128xf32> to vector<8x128xf32>
    %218 = arith.select %215, %217, %197 : vector<8x128xi1>, vector<8x128xf32>
    %c-1_i32_53 = arith.constant -1 : i32
    %219 = vector.broadcast %c-1_i32_53 : i32 to vector<1x128xi32>
    %220 = arith.select %209, %219, %199 : vector<1x128xi1>, vector<1x128xi32>
    %c6_i32 = arith.constant 6 : i32
    %cst_54 = arith.constant dense<-2147483648> : vector<1xi32>
    %221 = vector.multi_reduction <maxsi>, %220, %cst_54 [1] : vector<1x128xi32> to vector<1xi32>
    %222 = vector.shape_cast %221 : vector<1xi32> to vector<1x1xi32>
    %223 = vector.broadcast %222 : vector<1x1xi32> to vector<1x128xi32>
    %224 = arith.cmpi eq, %220, %223 : vector<1x128xi32>
    %c128_i32_55 = arith.constant 128 : i32
    %225 = vector.broadcast %c128_i32_55 : i32 to vector<1x128xi32>
    %226 = arith.select %224, %0, %225 : vector<1x128xi1>, vector<1x128xi32>
    %cst_56 = arith.constant dense<2147483647> : vector<1xi32>
    %227 = vector.multi_reduction <minsi>, %226, %cst_56 [1] : vector<1x128xi32> to vector<1xi32>
    %228 = vector.shape_cast %227 : vector<1xi32> to vector<1x1xi32>
    %229 = vector.broadcast %228 : vector<1x1xi32> to vector<1x128xi32>
    %230 = arith.cmpi eq, %0, %229 : vector<1x128xi32>
    %231 = vector.broadcast %c6_i32 : i32 to vector<8x1xi32>
    %232 = arith.cmpi eq, %93, %231 : vector<8x1xi32>
    %233 = arith.extui %230 : vector<1x128xi1> to vector<1x128xi32>
    %234 = arith.sitofp %233 : vector<1x128xi32> to vector<1x128xf32>
    %235 = vector.shape_cast %232 : vector<8x1xi1> to vector<8x1xi1>
    %236 = vector.broadcast %235 : vector<8x1xi1> to vector<8x128xi1>
    %237 = vector.shape_cast %234 : vector<1x128xf32> to vector<1x128xf32>
    %238 = vector.broadcast %237 : vector<1x128xf32> to vector<8x128xf32>
    %239 = arith.select %236, %238, %218 : vector<8x128xi1>, vector<8x128xf32>
    %c-1_i32_57 = arith.constant -1 : i32
    %240 = vector.broadcast %c-1_i32_57 : i32 to vector<1x128xi32>
    %241 = arith.select %230, %240, %220 : vector<1x128xi1>, vector<1x128xi32>
    %c7_i32 = arith.constant 7 : i32
    %cst_58 = arith.constant dense<-2147483648> : vector<1xi32>
    %242 = vector.multi_reduction <maxsi>, %241, %cst_58 [1] : vector<1x128xi32> to vector<1xi32>
    %243 = vector.shape_cast %242 : vector<1xi32> to vector<1x1xi32>
    %244 = vector.broadcast %243 : vector<1x1xi32> to vector<1x128xi32>
    %245 = arith.cmpi eq, %241, %244 : vector<1x128xi32>
    %c128_i32_59 = arith.constant 128 : i32
    %246 = vector.broadcast %c128_i32_59 : i32 to vector<1x128xi32>
    %247 = arith.select %245, %0, %246 : vector<1x128xi1>, vector<1x128xi32>
    %cst_60 = arith.constant dense<2147483647> : vector<1xi32>
    %248 = vector.multi_reduction <minsi>, %247, %cst_60 [1] : vector<1x128xi32> to vector<1xi32>
    %249 = vector.shape_cast %248 : vector<1xi32> to vector<1x1xi32>
    %250 = vector.broadcast %249 : vector<1x1xi32> to vector<1x128xi32>
    %251 = arith.cmpi eq, %0, %250 : vector<1x128xi32>
    %252 = vector.broadcast %c7_i32 : i32 to vector<8x1xi32>
    %253 = arith.cmpi eq, %93, %252 : vector<8x1xi32>
    %254 = arith.extui %251 : vector<1x128xi1> to vector<1x128xi32>
    %255 = arith.sitofp %254 : vector<1x128xi32> to vector<1x128xf32>
    %256 = vector.shape_cast %253 : vector<8x1xi1> to vector<8x1xi1>
    %257 = vector.broadcast %256 : vector<8x1xi1> to vector<8x128xi1>
    %258 = vector.shape_cast %255 : vector<1x128xf32> to vector<1x128xf32>
    %259 = vector.broadcast %258 : vector<1x128xf32> to vector<8x128xf32>
    %260 = arith.select %257, %259, %239 : vector<8x128xi1>, vector<8x128xf32>
    %c-1_i32_61 = arith.constant -1 : i32
    %261 = vector.broadcast %c-1_i32_61 : i32 to vector<1x128xi32>
    %262 = arith.select %251, %261, %241 : vector<1x128xi1>, vector<1x128xi32>
    %c8_i32 = arith.constant 8 : i32
    %c0_62 = arith.constant 0 : index
    %c0_63 = arith.constant 0 : index
    %263 = vector.load %arg3[%c0_62, %c0_63] : memref<128x128xf32, #tpu.memory_space<vmem>>, vector<128x128xf32>
    %cst_64 = arith.constant dense<0.000000e+00> : vector<8x128xf32>
    %264 = tpu.matmul %260, %263, %cst_64 {dimension_numbers = #tpu.dot_dimension_numbers<[1], [0], [0], [1], [0, 0, 1, 1], [], []>, precision = #tpu.contract_precision<fp32>} : vector<8x128xf32>, vector<128x128xf32>, vector<8x128xf32> -> vector<8x128xf32>
    %c0_65 = arith.constant 0 : index
    %c0_66 = arith.constant 0 : index
    %265 = vector.load %arg4[%c0_65, %c0_66] : memref<8x128xf32, #tpu.memory_space<vmem>>, vector<8x128xf32>
    tpu.vector_store %arg4[%c0_65, %c0_66], %264 {strides = array<i32>} : memref<8x128xf32, #tpu.memory_space<vmem>>, vector<8x128xf32>,
    return
  }
  func.func @transform_0(%arg0: i32) -> (i32, i32) {
    %c0_i32 = arith.constant 0 : i32
    %c0_i32_0 = arith.constant 0 : i32
    %c0_i32_1 = arith.constant 0 : i32
    return %c0_i32, %c0_i32_0 : i32, i32
  }
  func.func @transform_1(%arg0: i32) -> (i32, i32) {
    %c0_i32 = arith.constant 0 : i32
    %c0_i32_0 = arith.constant 0 : i32
    %c0_i32_1 = arith.constant 0 : i32
    return %c0_i32, %c0_i32_0 : i32, i32
  }
  func.func @transform_2(%arg0: i32) -> (i32, i32) {
    %c0_i32 = arith.constant 0 : i32
    %c0_i32_0 = arith.constant 0 : i32
    %c0_i32_1 = arith.constant 0 : i32
    return %c0_i32, %c0_i32_0 : i32, i32
  }
  func.func @transform_3(%arg0: i32) -> (i32, i32) {
    %c0_i32 = arith.constant 0 : i32
    %c0_i32_0 = arith.constant 0 : i32
    %c0_i32_1 = arith.constant 0 : i32
    return %c0_i32, %c0_i32_0 : i32, i32
  }
}

</mosaic_0001>

<llo_original>
// kernel: tpu_custom_call.1
$region0: #{tpu_custom_call.1}
  #allocation0 [shape = 'u32[]', space=smem, size = 0x4, offset = 0x4, fixed_abs, tag = 'smem constant byte address 0x4 - core index']
  #allocation1 [shape = 'u32[144,128]{1,0:T(1,128)}', space=vmem, size = 0x12000, scoped, tag = 'internal scratch']
  %s0 = inlined_call_operand.vmem [shape: f32[1,128], index: 0, kind: input, shape index: {}]
  %s1 = inlined_call_operand.vmem [shape: f32[1280,1], index: 1, kind: input, shape index: {}]
  %s2 = inlined_call_operand.vmem [shape: f32[128,128], index: 2, kind: input, shape index: {}]
  %s3 = inlined_call_operand.hbm [shape: f32[8,128], index: 3, kind: output, shape index: {}]
  %s4 = sld [smem:[#allocation0]]
  $region22: #{tpu_custom_call.1} parent=0
    _
  %s6 = ssub.s32 1, %s4
  %s7 = scalar_select 0, %s6, %s4
  $region1: #{tpu_custom_call.1} parent=0
    #allocation2 [shape = 'u8[4096]{0}', space=vmem, size = 0x1000, scoped, tag = 'output window, operand 0, single buffered']
    #allocation3 [shape = 's32[1]{0}', space=sflag, size = 0x4, scoped, tag = 'scoped memory for tpu_custom_call.1']
    %8 = vsyncpa [#allocation3], 0
    // Predicated region
    $region2: #{tpu_custom_call.1} parent=1 // pred_check
      _
    $region3: #{tpu_custom_call.1} parent=1 // pred_check_branch
      %10 = sbr.rel (0) target = $region5
    $region4: #{tpu_custom_call.1} parent=1 // pred_region
      _
    $region5: #{tpu_custom_call.1} parent=1 // pred_fallthru
      _
    // Predicated region
    $region6: #{tpu_custom_call.1} parent=1 // pred_check
      _
    $region7: #{tpu_custom_call.1} parent=1 // pred_check_branch
      %12 = sbr.rel (0) target = $region9
    $region8: #{tpu_custom_call.1} parent=1 // pred_region
      _
    $region9: #{tpu_custom_call.1} parent=1 // pred_fallthru
      _
    // Predicated region
    $region10: #{tpu_custom_call.1} parent=1 // pred_check
      _
    $region11: #{tpu_custom_call.1} parent=1 // pred_check_branch
      %14 = sbr.rel (0) target = $region13
    $region12: #{tpu_custom_call.1} parent=1 // pred_region
      _
    $region13: #{tpu_custom_call.1} parent=1 // pred_fallthru
      _
    %v15 = vlaneseq
    %v16 = vand.u32 %v15, 127
    %v17 = vld [vmem:[%s0] sm:$0x1]
    %vm18 = vcmask 1040384
    %v19 = vsel %vm18, %v17, 0.0
    %20 = vadd.xlane.f32.xlu0 %v19
    %v21 = vpop.xlane.xlu0 %20
    %v22 = vrcp.pop %v21
    %v23 = vmul.f32 %v17, %v22
    %v25 = vlaneseq
    %v26 = vshrl.u32 %v25, 7
    %v27 = vsub.s32 0, %v26
    %v28 = vrot.slane %v23, %v27
    %29 = vrot.lane.b32.xlu0 %v28, 1
    %v30 = vpop.permute.xlu0 %29
    %vm32 = vcmask 7168
    %v33 = vsel %vm32, 0.0, %v30
    %v34 = vadd.f32 %v23, %v33
    %v36 = vlaneseq
    %v37 = vshrl.u32 %v36, 7
    %v38 = vsub.s32 0, %v37
    %v39 = vrot.slane %v34, %v38
    %40 = vrot.lane.b32.xlu0 %v39, 2
    %v41 = vpop.permute.xlu0 %40
    %vm43 = vcmask 15360
    %v44 = vsel %vm43, 0.0, %v41
    %v45 = vadd.f32 %v34, %v44
    %v47 = vlaneseq
    %v48 = vshrl.u32 %v47, 7
    %v49 = vsub.s32 0, %v48
    %v50 = vrot.slane %v45, %v49
    %51 = vrot.lane.b32.xlu0 %v50, 4
    %v52 = vpop.permute.xlu0 %51
    %vm54 = vcmask 31744
    %v55 = vsel %vm54, 0.0, %v52
    %v56 = vadd.f32 %v45, %v55
    %v58 = vlaneseq
    %v59 = vshrl.u32 %v58, 7
    %v60 = vsub.s32 0, %v59
    %v61 = vrot.slane %v56, %v60
    %62 = vrot.lane.b32.xlu0 %v61, 8
    %v63 = vpop.permute.xlu0 %62
    %vm65 = vcmask 64512
    %v66 = vsel %vm65, 0.0, %v63
    %v67 = vadd.f32 %v56, %v66
    %v69 = vlaneseq
    %v70 = vshrl.u32 %v69, 7
    %v71 = vsub.s32 0, %v70
    %v72 = vrot.slane %v67, %v71
    %73 = vrot.lane.b32.xlu0 %v72, 16
    %v74 = vpop.permute.xlu0 %73
    %vm76 = vcmask 130048
    %v77 = vsel %vm76, 0.0, %v74
    %v78 = vadd.f32 %v67, %v77
    %v80 = vlaneseq
    %v81 = vshrl.u32 %v80, 7
    %v82 = vsub.s32 0, %v81
    %v83 = vrot.slane %v78, %v82
    %84 = vrot.lane.b32.xlu0 %v83, 32
    %v85 = vpop.permute.xlu0 %84
    %vm87 = vcmask 261120
    %v88 = vsel %vm87, 0.0, %v85
    %v89 = vadd.f32 %v78, %v88
    %v91 = vlaneseq
    %v92 = vshrl.u32 %v91, 7
    %v93 = vsub.s32 0, %v92
    %v94 = vrot.slane %v89, %v93
    %95 = vrot.lane.b32.xlu0 %v94, 64
    %v96 = vpop.permute.xlu0 %95
    %vm98 = vcmask 523264
    %v99 = vsel %vm98, 0.0, %v96
    %v100 = vadd.f32 %v89, %v99
    %vm101 = vcmp.eq.s32.totalorder %v16, 127
    %v102 = vsel %vm101, 1.0, %v100
    %v103 = vld [vmem:[%s1] sm:$0xff]
    %v104 = vld [vmem:[%s1 + $0x8] sm:$0xff]
    %v105 = vld [vmem:[%s1 + $0x10] sm:$0xff]
    %v106 = vld [vmem:[%s1 + $0x18] sm:$0xff]
    %v107 = vld [vmem:[%s1 + $0x20] sm:$0xff]
    %v108 = vld [vmem:[%s1 + $0x28] sm:$0xff]
    %v109 = vld [vmem:[%s1 + $0x30] sm:$0xff]
    %v110 = vld [vmem:[%s1 + $0x38] sm:$0xff]
    %v111 = vld [vmem:[%s1 + $0x40] sm:$0xff]
    %v112 = vld [vmem:[%s1 + $0x48] sm:$0xff]
    %v113 = vld [vmem:[%s1 + $0x50] sm:$0xff]
    %v114 = vld [vmem:[%s1 + $0x58] sm:$0xff]
    %v115 = vld [vmem:[%s1 + $0x60] sm:$0xff]
    %v116 = vld [vmem:[%s1 + $0x68] sm:$0xff]
    %v117 = vld [vmem:[%s1 + $0x70] sm:$0xff]
    %v118 = vld [vmem:[%s1 + $0x78] sm:$0xff]
    %v119 = vld [vmem:[%s1 + $0x80] sm:$0xff]
    %v120 = vld [vmem:[%s1 + $0x88] sm:$0xff]
    %v121 = vld [vmem:[%s1 + $0x90] sm:$0xff]
    %v122 = vld [vmem:[%s1 + $0x98] sm:$0xff]
    %v123 = vld [vmem:[%s1 + $0xa0] sm:$0xff]
    %v124 = vld [vmem:[%s1 + $0xa8] sm:$0xff]
    %v125 = vld [vmem:[%s1 + $0xb0] sm:$0xff]
    %v126 = vld [vmem:[%s1 + $0xb8] sm:$0xff]
    %v127 = vld [vmem:[%s1 + $0xc0] sm:$0xff]
    %v128 = vld [vmem:[%s1 + $0xc8] sm:$0xff]
    %v129 = vld [vmem:[%s1 + $0xd0] sm:$0xff]
    %v130 = vld [vmem:[%s1 + $0xd8] sm:$0xff]
    %v131 = vld [vmem:[%s1 + $0xe0] sm:$0xff]
    %v132 = vld [vmem:[%s1 + $0xe8] sm:$0xff]
    %v133 = vld [vmem:[%s1 + $0xf0] sm:$0xff]
    %v134 = vld [vmem:[%s1 + $0xf8] sm:$0xff]
    %136 = vset.pattern.permute.xlu0 0
    %137 = vperm.xlu0 %136, %v103
    %v138 = vpop.permute.xlu0 %137
    %141 = vset.pattern.permute.xlu0 0
    %142 = vperm.xlu0 %141, %v104
    %v143 = vpop.permute.xlu0 %142
    %146 = vset.pattern.permute.xlu0 0
    %147 = vperm.xlu0 %146, %v105
    %v148 = vpop.permute.xlu0 %147
    %151 = vset.pattern.permute.xlu0 0
    %152 = vperm.xlu0 %151, %v106
    %v153 = vpop.permute.xlu0 %152
    %156 = vset.pattern.permute.xlu0 0
    %157 = vperm.xlu0 %156, %v107
    %v158 = vpop.permute.xlu0 %157
    %161 = vset.pattern.permute.xlu0 0
    %162 = vperm.xlu0 %161, %v108
    %v163 = vpop.permute.xlu0 %162
    %166 = vset.pattern.permute.xlu0 0
    %167 = vperm.xlu0 %166, %v109
    %v168 = vpop.permute.xlu0 %167
    %171 = vset.pattern.permute.xlu0 0
    %172 = vperm.xlu0 %171, %v110
    %v173 = vpop.permute.xlu0 %172
    %176 = vset.pattern.permute.xlu0 0
    %177 = vperm.xlu0 %176, %v111
    %v178 = vpop.permute.xlu0 %177
    %181 = vset.pattern.permute.xlu0 0
    %182 = vperm.xlu0 %181, %v112
    %v183 = vpop.permute.xlu0 %182
    %186 = vset.pattern.permute.xlu0 0
    %187 = vperm.xlu0 %186, %v113
    %v188 = vpop.permute.xlu0 %187
    %191 = vset.pattern.permute.xlu0 0
    %192 = vperm.xlu0 %191, %v114
    %v193 = vpop.permute.xlu0 %192
    %196 = vset.pattern.permute.xlu0 0
    %197 = vperm.xlu0 %196, %v115
    %v198 = vpop.permute.xlu0 %197
    %201 = vset.pattern.permute.xlu0 0
    %202 = vperm.xlu0 %201, %v116
    %v203 = vpop.permute.xlu0 %202
    %206 = vset.pattern.permute.xlu0 0
    %207 = vperm.xlu0 %206, %v117
    %v208 = vpop.permute.xlu0 %207
    %211 = vset.pattern.permute.xlu0 0
    %212 = vperm.xlu0 %211, %v118
    %v213 = vpop.permute.xlu0 %212
    %216 = vset.pattern.permute.xlu0 0
    %217 = vperm.xlu0 %216, %v119
    %v218 = vpop.permute.xlu0 %217
    %221 = vset.pattern.permute.xlu0 0
    %222 = vperm.xlu0 %221, %v120
    %v223 = vpop.permute.xlu0 %222
    %226 = vset.pattern.permute.xlu0 0
    %227 = vperm.xlu0 %226, %v121
    %v228 = vpop.permute.xlu0 %227
    %231 = vset.pattern.permute.xlu0 0
    %232 = vperm.xlu0 %231, %v122
    %v233 = vpop.permute.xlu0 %232
    %236 = vset.pattern.permute.xlu0 0
    %237 = vperm.xlu0 %236, %v123
    %v238 = vpop.permute.xlu0 %237
    %241 = vset.pattern.permute.xlu0 0
    %242 = vperm.xlu0 %241, %v124
    %v243 = vpop.permute.xlu0 %242
    %246 = vset.pattern.permute.xlu0 0
    %247 = vperm.xlu0 %246, %v125
    %v248 = vpop.permute.xlu0 %247
    %251 = vset.pattern.permute.xlu0 0
    %252 = vperm.xlu0 %251, %v126
    %v253 = vpop.permute.xlu0 %252
    %256 = vset.pattern.permute.xlu0 0
    %257 = vperm.xlu0 %256, %v127
    %v258 = vpop.permute.xlu0 %257
    %261 = vset.pattern.permute.xlu0 0
    %262 = vperm.xlu0 %261, %v128
    %v263 = vpop.permute.xlu0 %262
    %266 = vset.pattern.permute.xlu0 0
    %267 = vperm.xlu0 %266, %v129
    %v268 = vpop.permute.xlu0 %267
    %271 = vset.pattern.permute.xlu0 0
    %272 = vperm.xlu0 %271, %v130
    %v273 = vpop.permute.xlu0 %272
    %276 = vset.pattern.permute.xlu0 0
    %277 = vperm.xlu0 %276, %v131
    %v278 = vpop.permute.xlu0 %277
    %281 = vset.pattern.permute.xlu0 0
    %282 = vperm.xlu0 %281, %v132
    %v283 = vpop.permute.xlu0 %282
    %286 = vset.pattern.permute.xlu0 0
    %287 = vperm.xlu0 %286, %v133
    %v288 = vpop.permute.xlu0 %287
    %291 = vset.pattern.permute.xlu0 0
    %292 = vperm.xlu0 %291, %v134
    %v293 = vpop.permute.xlu0 %292
    %v295 = vlaneseq
    %v296 = vshrl.u32 %v295, 7
    %v297 = vsub.s32 0, %v296
    %v298 = vrot.slane %v102, %v297
    %vm299 = vcmp.lt.f32.partialorder %v138, %v298
    %vm300 = vcmp.lt.f32.partialorder %v143, %v298
    %vm301 = vcmp.lt.f32.partialorder %v148, %v298
    %vm302 = vcmp.lt.f32.partialorder %v153, %v298
    %vm303 = vcmp.lt.f32.partialorder %v158, %v298
    %vm304 = vcmp.lt.f32.partialorder %v163, %v298
    %vm305 = vcmp.lt.f32.partialorder %v168, %v298
    %vm306 = vcmp.lt.f32.partialorder %v173, %v298
    %vm307 = vcmp.lt.f32.partialorder %v178, %v298
    %vm308 = vcmp.lt.f32.partialorder %v183, %v298
    %vm309 = vcmp.lt.f32.partialorder %v188, %v298
    %vm310 = vcmp.lt.f32.partialorder %v193, %v298
    %vm311 = vcmp.lt.f32.partialorder %v198, %v298
    %vm312 = vcmp.lt.f32.partialorder %v203, %v298
    %vm313 = vcmp.lt.f32.partialorder %v208, %v298
    %vm314 = vcmp.lt.f32.partialorder %v213, %v298
    %vm315 = vcmp.lt.f32.partialorder %v218, %v298
    %vm316 = vcmp.lt.f32.partialorder %v223, %v298
    %vm317 = vcmp.lt.f32.partialorder %v228, %v298
    %vm318 = vcmp.lt.f32.partialorder %v233, %v298
    %vm319 = vcmp.lt.f32.partialorder %v238, %v298
    %vm320 = vcmp.lt.f32.partialorder %v243, %v298
    %vm321 = vcmp.lt.f32.partialorder %v248, %v298
    %vm322 = vcmp.lt.f32.partialorder %v253, %v298
    %vm323 = vcmp.lt.f32.partialorder %v258, %v298
    %vm324 = vcmp.lt.f32.partialorder %v263, %v298
    %vm325 = vcmp.lt.f32.partialorder %v268, %v298
    %vm326 = vcmp.lt.f32.partialorder %v273, %v298
    %vm327 = vcmp.lt.f32.partialorder %v278, %v298
    %vm328 = vcmp.lt.f32.partialorder %v283, %v298
    %vm329 = vcmp.lt.f32.partialorder %v288, %v298
    %vm330 = vcmp.lt.f32.partialorder %v293, %v298
    %v331 = vsel %vm299, 1, 0
    %v332 = vsel %vm300, 1, 0
    %v333 = vsel %vm301, 1, 0
    %v334 = vsel %vm302, 1, 0
    %v335 = vsel %vm303, 1, 0
    %v336 = vsel %vm304, 1, 0
    %v337 = vsel %vm305, 1, 0
    %v338 = vsel %vm306, 1, 0
    %v339 = vsel %vm307, 1, 0
    %v340 = vsel %vm308, 1, 0
    %v341 = vsel %vm309, 1, 0
    %v342 = vsel %vm310, 1, 0
    %v343 = vsel %vm311, 1, 0
    %v344 = vsel %vm312, 1, 0
    %v345 = vsel %vm313, 1, 0
    %v346 = vsel %vm314, 1, 0
    %v347 = vsel %vm315, 1, 0
    %v348 = vsel %vm316, 1, 0
    %v349 = vsel %vm317, 1, 0
    %v350 = vsel %vm318, 1, 0
    %v351 = vsel %vm319, 1, 0
    %v352 = vsel %vm320, 1, 0
    %v353 = vsel %vm321, 1, 0
    %v354 = vsel %vm322, 1, 0
    %v355 = vsel %vm323, 1, 0
    %v356 = vsel %vm324, 1, 0
    %v357 = vsel %vm325, 1, 0
    %v358 = vsel %vm326, 1, 0
    %v359 = vsel %vm327, 1, 0
    %v360 = vsel %vm328, 1, 0
    %v361 = vsel %vm329, 1, 0
    %v362 = vsel %vm330, 1, 0
    %v363 = vadd.s32 %v331, %v335
    %v364 = vadd.s32 %v332, %v336
    %v365 = vadd.s32 %v333, %v337
    %v366 = vadd.s32 %v334, %v338
    %v367 = vadd.s32 %v363, %v339
    %v368 = vadd.s32 %v364, %v340
    %v369 = vadd.s32 %v365, %v341
    %v370 = vadd.s32 %v366, %v342
    %v371 = vadd.s32 %v367, %v343
    %v372 = vadd.s32 %v368, %v344
    %v373 = vadd.s32 %v369, %v345
    %v374 = vadd.s32 %v370, %v346
    %v375 = vadd.s32 %v371, %v347
    %v376 = vadd.s32 %v372, %v348
    %v377 = vadd.s32 %v373, %v349
    %v378 = vadd.s32 %v374, %v350
    %v379 = vadd.s32 %v375, %v351
    %v380 = vadd.s32 %v376, %v352
    %v381 = vadd.s32 %v377, %v353
    %v382 = vadd.s32 %v378, %v354
    %v383 = vadd.s32 %v379, %v355
    %v384 = vadd.s32 %v380, %v356
    %v385 = vadd.s32 %v381, %v357
    %v386 = vadd.s32 %v382, %v358
    %v387 = vadd.s32 %v383, %v359
    %v388 = vadd.s32 %v384, %v360
    %v389 = vadd.s32 %v385, %v361
    %v390 = vadd.s32 %v386, %v362
    %v391 = vadd.s32 %v387, %v388
    %v392 = vadd.s32 %v389, %v390
    %v393 = vadd.s32 %v391, %v392
    %v394 = vrot.slane %v393, 4
    %v395 = vadd.s32 %v393, %v394
    %v396 = vrot.slane %v395, 2
    %v397 = vadd.s32 %v395, %v396
    %v398 = vrot.slane %v397, 1
    %v399 = vadd.s32 %v397, %v398
    %v400 = vld [vmem:[%s1 + $0x100] sm:$0xff]
    %v401 = vld [vmem:[%s1 + $0x108] sm:$0xff]
    %v402 = vld [vmem:[%s1 + $0x110] sm:$0xff]
    %v403 = vld [vmem:[%s1 + $0x118] sm:$0xff]
    %v404 = vld [vmem:[%s1 + $0x120] sm:$0xff]
    %v405 = vld [vmem:[%s1 + $0x128] sm:$0xff]
    %v406 = vld [vmem:[%s1 + $0x130] sm:$0xff]
    %v407 = vld [vmem:[%s1 + $0x138] sm:$0xff]
    %v408 = vld [vmem:[%s1 + $0x140] sm:$0xff]
    %v409 = vld [vmem:[%s1 + $0x148] sm:$0xff]
    %v410 = vld [vmem:[%s1 + $0x150] sm:$0xff]
    %v411 = vld [vmem:[%s1 + $0x158] sm:$0xff]
    %v412 = vld [vmem:[%s1 + $0x160] sm:$0xff]
    %v413 = vld [vmem:[%s1 + $0x168] sm:$0xff]
    %v414 = vld [vmem:[%s1 + $0x170] sm:$0xff]
    %v415 = vld [vmem:[%s1 + $0x178] sm:$0xff]
    %v416 = vld [vmem:[%s1 + $0x180] sm:$0xff]
    %v417 = vld [vmem:[%s1 + $0x188] sm:$0xff]
    %v418 = vld [vmem:[%s1 + $0x190] sm:$0xff]
    %v419 = vld [vmem:[%s1 + $0x198] sm:$0xff]
    %v420 = vld [vmem:[%s1 + $0x1a0] sm:$0xff]
    %v421 = vld [vmem:[%s1 + $0x1a8] sm:$0xff]
    %v422 = vld [vmem:[%s1 + $0x1b0] sm:$0xff]
    %v423 = vld [vmem:[%s1 + $0x1b8] sm:$0xff]
    %v424 = vld [vmem:[%s1 + $0x1c0] sm:$0xff]
    %v425 = vld [vmem:[%s1 + $0x1c8] sm:$0xff]
    %v426 = vld [vmem:[%s1 + $0x1d0] sm:$0xff]
    %v427 = vld [vmem:[%s1 + $0x1d8] sm:$0xff]
    %v428 = vld [vmem:[%s1 + $0x1e0] sm:$0xff]
    %v429 = vld [vmem:[%s1 + $0x1e8] sm:$0xff]
    %v430 = vld [vmem:[%s1 + $0x1f0] sm:$0xff]
    %v431 = vld [vmem:[%s1 + $0x1f8] sm:$0xff]
    %433 = vset.pattern.permute.xlu0 0
    %434 = vperm.xlu0 %433, %v400
    %v435 = vpop.permute.xlu0 %434
    %438 = vset.pattern.permute.xlu0 0
    %439 = vperm.xlu0 %438, %v401
    %v440 = vpop.permute.xlu0 %439
    %443 = vset.pattern.permute.xlu0 0
    %444 = vperm.xlu0 %443, %v402
    %v445 = vpop.permute.xlu0 %444
    %448 = vset.pattern.permute.xlu0 0
    %449 = vperm.xlu0 %448, %v403
    %v450 = vpop.permute.xlu0 %449
    %453 = vset.pattern.permute.xlu0 0
    %454 = vperm.xlu0 %453, %v404
    %v455 = vpop.permute.xlu0 %454
    %458 = vset.pattern.permute.xlu0 0
    %459 = vperm.xlu0 %458, %v405
    %v460 = vpop.permute.xlu0 %459
    %463 = vset.pattern.permute.xlu0 0
    %464 = vperm.xlu0 %463, %v406
    %v465 = vpop.permute.xlu0 %464
    %468 = vset.pattern.permute.xlu0 0
    %469 = vperm.xlu0 %468, %v407
    %v470 = vpop.permute.xlu0 %469
    %473 = vset.pattern.permute.xlu0 0
    %474 = vperm.xlu0 %473, %v408
    %v475 = vpop.permute.xlu0 %474
    %478 = vset.pattern.permute.xlu0 0
    %479 = vperm.xlu0 %478, %v409
    %v480 = vpop.permute.xlu0 %479
    %483 = vset.pattern.permute.xlu0 0
    %484 = vperm.xlu0 %483, %v410
    %v485 = vpop.permute.xlu0 %484
    %488 = vset.pattern.permute.xlu0 0
    %489 = vperm.xlu0 %488, %v411
    %v490 = vpop.permute.xlu0 %489
    %493 = vset.pattern.permute.xlu0 0
    %494 = vperm.xlu0 %493, %v412
    %v495 = vpop.permute.xlu0 %494
    %498 = vset.pattern.permute.xlu0 0
    %499 = vperm.xlu0 %498, %v413
    %v500 = vpop.permute.xlu0 %499
    %503 = vset.pattern.permute.xlu0 0
    %504 = vperm.xlu0 %503, %v414
    %v505 = vpop.permute.xlu0 %504
    %508 = vset.pattern.permute.xlu0 0
    %509 = vperm.xlu0 %508, %v415
    %v510 = vpop.permute.xlu0 %509
    %513 = vset.pattern.permute.xlu0 0
    %514 = vperm.xlu0 %513, %v416
    %v515 = vpop.permute.xlu0 %514
    %518 = vset.pattern.permute.xlu0 0
    %519 = vperm.xlu0 %518, %v417
    %v520 = vpop.permute.xlu0 %519
    %523 = vset.pattern.permute.xlu0 0
    %524 = vperm.xlu0 %523, %v418
    %v525 = vpop.permute.xlu0 %524
    %528 = vset.pattern.permute.xlu0 0
    %529 = vperm.xlu0 %528, %v419
    %v530 = vpop.permute.xlu0 %529
    %533 = vset.pattern.permute.xlu0 0
    %534 = vperm.xlu0 %533, %v420
    %v535 = vpop.permute.xlu0 %534
    %538 = vset.pattern.permute.xlu0 0
    %539 = vperm.xlu0 %538, %v421
    %v540 = vpop.permute.xlu0 %539
    %543 = vset.pattern.permute.xlu0 0
    %544 = vperm.xlu0 %543, %v422
    %v545 = vpop.permute.xlu0 %544
    %548 = vset.pattern.permute.xlu0 0
    %549 = vperm.xlu0 %548, %v423
    %v550 = vpop.permute.xlu0 %549
    %553 = vset.pattern.permute.xlu0 0
    %554 = vperm.xlu0 %553, %v424
    %v555 = vpop.permute.xlu0 %554
    %558 = vset.pattern.permute.xlu0 0
    %559 = vperm.xlu0 %558, %v425
    %v560 = vpop.permute.xlu0 %559
    %563 = vset.pattern.permute.xlu0 0
    %564 = vperm.xlu0 %563, %v426
    %v565 = vpop.permute.xlu0 %564
    %568 = vset.pattern.permute.xlu0 0
    %569 = vperm.xlu0 %568, %v427
    %v570 = vpop.permute.xlu0 %569
    %573 = vset.pattern.permute.xlu0 0
    %574 = vperm.xlu0 %573, %v428
    %v575 = vpop.permute.xlu0 %574
    %578 = vset.pattern.permute.xlu0 0
    %579 = vperm.xlu0 %578, %v429
    %v580 = vpop.permute.xlu0 %579
    %583 = vset.pattern.permute.xlu0 0
    %584 = vperm.xlu0 %583, %v430
    %v585 = vpop.permute.xlu0 %584
    %588 = vset.pattern.permute.xlu0 0
    %589 = vperm.xlu0 %588, %v431
    %v590 = vpop.permute.xlu0 %589
    %vm592 = vcmp.lt.f32.partialorder %v435, %v298
    %vm593 = vcmp.lt.f32.partialorder %v440, %v298
    %vm594 = vcmp.lt.f32.partialorder %v445, %v298
    %vm595 = vcmp.lt.f32.partialorder %v450, %v298
    %vm596 = vcmp.lt.f32.partialorder %v455, %v298
    %vm597 = vcmp.lt.f32.partialorder %v460, %v298
    %vm598 = vcmp.lt.f32.partialorder %v465, %v298
    %vm599 = vcmp.lt.f32.partialorder %v470, %v298
    %vm600 = vcmp.lt.f32.partialorder %v475, %v298
    %vm601 = vcmp.lt.f32.partialorder %v480, %v298
    %vm602 = vcmp.lt.f32.partialorder %v485, %v298
    %vm603 = vcmp.lt.f32.partialorder %v490, %v298
    %vm604 = vcmp.lt.f32.partialorder %v495, %v298
    %vm605 = vcmp.lt.f32.partialorder %v500, %v298
    %vm606 = vcmp.lt.f32.partialorder %v505, %v298
    %vm607 = vcmp.lt.f32.partialorder %v510, %v298
    %vm608 = vcmp.lt.f32.partialorder %v515, %v298
    %vm609 = vcmp.lt.f32.partialorder %v520, %v298
    %vm610 = vcmp.lt.f32.partialorder %v525, %v298
    %vm611 = vcmp.lt.f32.partialorder %v530, %v298
    %vm612 = vcmp.lt.f32.partialorder %v535, %v298
    %vm613 = vcmp.lt.f32.partialorder %v540, %v298
    %vm614 = vcmp.lt.f32.partialorder %v545, %v298
    %vm615 = vcmp.lt.f32.partialorder %v550, %v298
    %vm616 = vcmp.lt.f32.partialorder %v555, %v298
    %vm617 = vcmp.lt.f32.partialorder %v560, %v298
    %vm618 = vcmp.lt.f32.partialorder %v565, %v298
    %vm619 = vcmp.lt.f32.partialorder %v570, %v298
    %vm620 = vcmp.lt.f32.partialorder %v575, %v298
    %vm621 = vcmp.lt.f32.partialorder %v580, %v298
    %vm622 = vcmp.lt.f32.partialorder %v585, %v298
    %vm623 = vcmp.lt.f32.partialorder %v590, %v298
    %v624 = vsel %vm592, 1, 0
    %v625 = vsel %vm593, 1, 0
    %v626 = vsel %vm594, 1, 0
    %v627 = vsel %vm595, 1, 0
    %v628 = vsel %vm596, 1, 0
    %v629 = vsel %vm597, 1, 0
    %v630 = vsel %vm598, 1, 0
    %v631 = vsel %vm599, 1, 0
    %v632 = vsel %vm600, 1, 0
    %v633 = vsel %vm601, 1, 0
    %v634 = vsel %vm602, 1, 0
    %v635 = vsel %vm603, 1, 0
    %v636 = vsel %vm604, 1, 0
    %v637 = vsel %vm605, 1, 0
    %v638 = vsel %vm606, 1, 0
    %v639 = vsel %vm607, 1, 0
    %v640 = vsel %vm608, 1, 0
    %v641 = vsel %vm609, 1, 0
    %v642 = vsel %vm610, 1, 0
    %v643 = vsel %vm611, 1, 0
    %v644 = vsel %vm612, 1, 0
    %v645 = vsel %vm613, 1, 0
    %v646 = vsel %vm614, 1, 0
    %v647 = vsel %vm615, 1, 0
    %v648 = vsel %vm616, 1, 0
    %v649 = vsel %vm617, 1, 0
    %v650 = vsel %vm618, 1, 0
    %v651 = vsel %vm619, 1, 0
    %v652 = vsel %vm620, 1, 0
    %v653 = vsel %vm621, 1, 0
    %v654 = vsel %vm622, 1, 0
    %v655 = vsel %vm623, 1, 0
    %v656 = vadd.s32 %v624, %v628
    %v657 = vadd.s32 %v625, %v629
    %v658 = vadd.s32 %v626, %v630
    %v659 = vadd.s32 %v627, %v631
    %v660 = vadd.s32 %v656, %v632
    %v661 = vadd.s32 %v657, %v633
    %v662 = vadd.s32 %v658, %v634
    %v663 = vadd.s32 %v659, %v635
    %v664 = vadd.s32 %v660, %v636
    %v665 = vadd.s32 %v661, %v637
    %v666 = vadd.s32 %v662, %v638
    %v667 = vadd.s32 %v663, %v639
    %v668 = vadd.s32 %v664, %v640
    %v669 = vadd.s32 %v665, %v641
    %v670 = vadd.s32 %v666, %v642
    %v671 = vadd.s32 %v667, %v643
    %v672 = vadd.s32 %v668, %v644
    %v673 = vadd.s32 %v669, %v645
    %v674 = vadd.s32 %v670, %v646
    %v675 = vadd.s32 %v671, %v647
    %v676 = vadd.s32 %v672, %v648
    %v677 = vadd.s32 %v673, %v649
    %v678 = vadd.s32 %v674, %v650
    %v679 = vadd.s32 %v675, %v651
    %v680 = vadd.s32 %v676, %v652
    %v681 = vadd.s32 %v677, %v653
    %v682 = vadd.s32 %v678, %v654
    %v683 = vadd.s32 %v679, %v655
    %v684 = vadd.s32 %v680, %v681
    %v685 = vadd.s32 %v682, %v683
    %v686 = vadd.s32 %v684, %v685
    %v687 = vrot.slane %v686, 4
    %v688 = vadd.s32 %v686, %v687
    %v689 = vrot.slane %v688, 2
    %v690 = vadd.s32 %v688, %v689
    %v691 = vrot.slane %v690, 1
    %v692 = vadd.s32 %v690, %v691
    %v693 = vadd.s32 %v399, %v692
    %v694 = vld [vmem:[%s1 + $0x200] sm:$0xff]
    %v695 = vld [vmem:[%s1 + $0x208] sm:$0xff]
    %v696 = vld [vmem:[%s1 + $0x210] sm:$0xff]
    %v697 = vld [vmem:[%s1 + $0x218] sm:$0xff]
    %v698 = vld [vmem:[%s1 + $0x220] sm:$0xff]
    %v699 = vld [vmem:[%s1 + $0x228] sm:$0xff]
    %v700 = vld [vmem:[%s1 + $0x230] sm:$0xff]
    %v701 = vld [vmem:[%s1 + $0x238] sm:$0xff]
    %v702 = vld [vmem:[%s1 + $0x240] sm:$0xff]
    %v703 = vld [vmem:[%s1 + $0x248] sm:$0xff]
    %v704 = vld [vmem:[%s1 + $0x250] sm:$0xff]
    %v705 = vld [vmem:[%s1 + $0x258] sm:$0xff]
    %v706 = vld [vmem:[%s1 + $0x260] sm:$0xff]
    %v707 = vld [vmem:[%s1 + $0x268] sm:$0xff]
    %v708 = vld [vmem:[%s1 + $0x270] sm:$0xff]
    %v709 = vld [vmem:[%s1 + $0x278] sm:$0xff]
    %v710 = vld [vmem:[%s1 + $0x280] sm:$0xff]
    %v711 = vld [vmem:[%s1 + $0x288] sm:$0xff]
    %v712 = vld [vmem:[%s1 + $0x290] sm:$0xff]
    %v713 = vld [vmem:[%s1 + $0x298] sm:$0xff]
    %v714 = vld [vmem:[%s1 + $0x2a0] sm:$0xff]
    %v715 = vld [vmem:[%s1 + $0x2a8] sm:$0xff]
    %v716 = vld [vmem:[%s1 + $0x2b0] sm:$0xff]
    %v717 = vld [vmem:[%s1 + $0x2b8] sm:$0xff]
    %v718 = vld [vmem:[%s1 + $0x2c0] sm:$0xff]
    %v719 = vld [vmem:[%s1 + $0x2c8] sm:$0xff]
    %v720 = vld [vmem:[%s1 + $0x2d0] sm:$0xff]
    %v721 = vld [vmem:[%s1 + $0x2d8] sm:$0xff]
    %v722 = vld [vmem:[%s1 + $0x2e0] sm:$0xff]
    %v723 = vld [vmem:[%s1 + $0x2e8] sm:$0xff]
    %v724 = vld [vmem:[%s1 + $0x2f0] sm:$0xff]
    %v725 = vld [vmem:[%s1 + $0x2f8] sm:$0xff]
    %727 = vset.pattern.permute.xlu0 0
    %728 = vperm.xlu0 %727, %v694
    %v729 = vpop.permute.xlu0 %728
    %732 = vset.pattern.permute.xlu0 0
    %733 = vperm.xlu0 %732, %v695
    %v734 = vpop.permute.xlu0 %733
    %737 = vset.pattern.permute.xlu0 0
    %738 = vperm.xlu0 %737, %v696
    %v739 = vpop.permute.xlu0 %738
    %742 = vset.pattern.permute.xlu0 0
    %743 = vperm.xlu0 %742, %v697
    %v744 = vpop.permute.xlu0 %743
    %747 = vset.pattern.permute.xlu0 0
    %748 = vperm.xlu0 %747, %v698
    %v749 = vpop.permute.xlu0 %748
    %752 = vset.pattern.permute.xlu0 0
    %753 = vperm.xlu0 %752, %v699
    %v754 = vpop.permute.xlu0 %753
    %757 = vset.pattern.permute.xlu0 0
    %758 = vperm.xlu0 %757, %v700
    %v759 = vpop.permute.xlu0 %758
    %762 = vset.pattern.permute.xlu0 0
    %763 = vperm.xlu0 %762, %v701
    %v764 = vpop.permute.xlu0 %763
    %767 = vset.pattern.permute.xlu0 0
    %768 = vperm.xlu0 %767, %v702
    %v769 = vpop.permute.xlu0 %768
    %772 = vset.pattern.permute.xlu0 0
    %773 = vperm.xlu0 %772, %v703
    %v774 = vpop.permute.xlu0 %773
    %777 = vset.pattern.permute.xlu0 0
    %778 = vperm.xlu0 %777, %v704
    %v779 = vpop.permute.xlu0 %778
    %782 = vset.pattern.permute.xlu0 0
    %783 = vperm.xlu0 %782, %v705
    %v784 = vpop.permute.xlu0 %783
    %787 = vset.pattern.permute.xlu0 0
    %788 = vperm.xlu0 %787, %v706
    %v789 = vpop.permute.xlu0 %788
    %792 = vset.pattern.permute.xlu0 0
    %793 = vperm.xlu0 %792, %v707
    %v794 = vpop.permute.xlu0 %793
    %797 = vset.pattern.permute.xlu0 0
    %798 = vperm.xlu0 %797, %v708
    %v799 = vpop.permute.xlu0 %798
    %802 = vset.pattern.permute.xlu0 0
    %803 = vperm.xlu0 %802, %v709
    %v804 = vpop.permute.xlu0 %803
    %807 = vset.pattern.permute.xlu0 0
    %808 = vperm.xlu0 %807, %v710
    %v809 = vpop.permute.xlu0 %808
    %812 = vset.pattern.permute.xlu0 0
    %813 = vperm.xlu0 %812, %v711
    %v814 = vpop.permute.xlu0 %813
    %817 = vset.pattern.permute.xlu0 0
    %818 = vperm.xlu0 %817, %v712
    %v819 = vpop.permute.xlu0 %818
    %822 = vset.pattern.permute.xlu0 0
    %823 = vperm.xlu0 %822, %v713
    %v824 = vpop.permute.xlu0 %823
    %827 = vset.pattern.permute.xlu0 0
    %828 = vperm.xlu0 %827, %v714
    %v829 = vpop.permute.xlu0 %828
    %832 = vset.pattern.permute.xlu0 0
    %833 = vperm.xlu0 %832, %v715
    %v834 = vpop.permute.xlu0 %833
    %837 = vset.pattern.permute.xlu0 0
    %838 = vperm.xlu0 %837, %v716
    %v839 = vpop.permute.xlu0 %838
    %842 = vset.pattern.permute.xlu0 0
    %843 = vperm.xlu0 %842, %v717
    %v844 = vpop.permute.xlu0 %843
    %847 = vset.pattern.permute.xlu0 0
    %848 = vperm.xlu0 %847, %v718
    %v849 = vpop.permute.xlu0 %848
    %852 = vset.pattern.permute.xlu0 0
    %853 = vperm.xlu0 %852, %v719
    %v854 = vpop.permute.xlu0 %853
    %857 = vset.pattern.permute.xlu0 0
    %858 = vperm.xlu0 %857, %v720
    %v859 = vpop.permute.xlu0 %858
    %862 = vset.pattern.permute.xlu0 0
    %863 = vperm.xlu0 %862, %v721
    %v864 = vpop.permute.xlu0 %863
    %867 = vset.pattern.permute.xlu0 0
    %868 = vperm.xlu0 %867, %v722
    %v869 = vpop.permute.xlu0 %868
    %872 = vset.pattern.permute.xlu0 0
    %873 = vperm.xlu0 %872, %v723
    %v874 = vpop.permute.xlu0 %873
    %877 = vset.pattern.permute.xlu0 0
    %878 = vperm.xlu0 %877, %v724
    %v879 = vpop.permute.xlu0 %878
    %882 = vset.pattern.permute.xlu0 0
    %883 = vperm.xlu0 %882, %v725
    %v884 = vpop.permute.xlu0 %883
    %vm886 = vcmp.lt.f32.partialorder %v729, %v298
    %vm887 = vcmp.lt.f32.partialorder %v734, %v298
    %vm888 = vcmp.lt.f32.partialorder %v739, %v298
    %vm889 = vcmp.lt.f32.partialorder %v744, %v298
    %vm890 = vcmp.lt.f32.partialorder %v749, %v298
    %vm891 = vcmp.lt.f32.partialorder %v754, %v298
    %vm892 = vcmp.lt.f32.partialorder %v759, %v298
    %vm893 = vcmp.lt.f32.partialorder %v764, %v298
    %vm894 = vcmp.lt.f32.partialorder %v769, %v298
    %vm895 = vcmp.lt.f32.partialorder %v774, %v298
    %vm896 = vcmp.lt.f32.partialorder %v779, %v298
    %vm897 = vcmp.lt.f32.partialorder %v784, %v298
    %vm898 = vcmp.lt.f32.partialorder %v789, %v298
    %vm899 = vcmp.lt.f32.partialorder %v794, %v298
    %vm900 = vcmp.lt.f32.partialorder %v799, %v298
    %vm901 = vcmp.lt.f32.partialorder %v804, %v298
    %vm902 = vcmp.lt.f32.partialorder %v809, %v298
    %vm903 = vcmp.lt.f32.partialorder %v814, %v298
    %vm904 = vcmp.lt.f32.partialorder %v819, %v298
    %vm905 = vcmp.lt.f32.partialorder %v824, %v298
    %vm906 = vcmp.lt.f32.partialorder %v829, %v298
    %vm907 = vcmp.lt.f32.partialorder %v834, %v298
    %vm908 = vcmp.lt.f32.partialorder %v839, %v298
    %vm909 = vcmp.lt.f32.partialorder %v844, %v298
    %vm910 = vcmp.lt.f32.partialorder %v849, %v298
    %vm911 = vcmp.lt.f32.partialorder %v854, %v298
    %vm912 = vcmp.lt.f32.partialorder %v859, %v298
    %vm913 = vcmp.lt.f32.partialorder %v864, %v298
    %vm914 = vcmp.lt.f32.partialorder %v869, %v298
    %vm915 = vcmp.lt.f32.partialorder %v874, %v298
    %vm916 = vcmp.lt.f32.partialorder %v879, %v298
    %vm917 = vcmp.lt.f32.partialorder %v884, %v298
    %v918 = vsel %vm886, 1, 0
    %v919 = vsel %vm887, 1, 0
    %v920 = vsel %vm888, 1, 0
    %v921 = vsel %vm889, 1, 0
    %v922 = vsel %vm890, 1, 0
    %v923 = vsel %vm891, 1, 0
    %v924 = vsel %vm892, 1, 0
    %v925 = vsel %vm893, 1, 0
    %v926 = vsel %vm894, 1, 0
    %v927 = vsel %vm895, 1, 0
    %v928 = vsel %vm896, 1, 0
    %v929 = vsel %vm897, 1, 0
    %v930 = vsel %vm898, 1, 0
    %v931 = vsel %vm899, 1, 0
    %v932 = vsel %vm900, 1, 0
    %v933 = vsel %vm901, 1, 0
    %v934 = vsel %vm902, 1, 0
    %v935 = vsel %vm903, 1, 0
    %v936 = vsel %vm904, 1, 0
    %v937 = vsel %vm905, 1, 0
    %v938 = vsel %vm906, 1, 0
    %v939 = vsel %vm907, 1, 0
    %v940 = vsel %vm908, 1, 0
    %v941 = vsel %vm909, 1, 0
    %v942 = vsel %vm910, 1, 0
    %v943 = vsel %vm911, 1, 0
    %v944 = vsel %vm912, 1, 0
    %v945 = vsel %vm913, 1, 0
    %v946 = vsel %vm914, 1, 0
    %v947 = vsel %vm915, 1, 0
    %v948 = vsel %vm916, 1, 0
    %v949 = vsel %vm917, 1, 0
    %v950 = vadd.s32 %v918, %v922
    %v951 = vadd.s32 %v919, %v923
    %v952 = vadd.s32 %v920, %v924
    %v953 = vadd.s32 %v921, %v925
    %v954 = vadd.s32 %v950, %v926
    %v955 = vadd.s32 %v951, %v927
    %v956 = vadd.s32 %v952, %v928
    %v957 = vadd.s32 %v953, %v929
    %v958 = vadd.s32 %v954, %v930
    %v959 = vadd.s32 %v955, %v931
    %v960 = vadd.s32 %v956, %v932
    %v961 = vadd.s32 %v957, %v933
    %v962 = vadd.s32 %v958, %v934
    %v963 = vadd.s32 %v959, %v935
    %v964 = vadd.s32 %v960, %v936
    %v965 = vadd.s32 %v961, %v937
    %v966 = vadd.s32 %v962, %v938
    %v967 = vadd.s32 %v963, %v939
    %v968 = vadd.s32 %v964, %v940
    %v969 = vadd.s32 %v965, %v941
    %v970 = vadd.s32 %v966, %v942
    %v971 = vadd.s32 %v967, %v943
    %v972 = vadd.s32 %v968, %v944
    %v973 = vadd.s32 %v969, %v945
    %v974 = vadd.s32 %v970, %v946
    %v975 = vadd.s32 %v971, %v947
    %v976 = vadd.s32 %v972, %v948
    %v977 = vadd.s32 %v973, %v949
    %v978 = vadd.s32 %v974, %v975
    %v979 = vadd.s32 %v976, %v977
    %v980 = vadd.s32 %v978, %v979
    %v981 = vrot.slane %v980, 4
    %v982 = vadd.s32 %v980, %v981
    %v983 = vrot.slane %v982, 2
    %v984 = vadd.s32 %v982, %v983
    %v985 = vrot.slane %v984, 1
    %v986 = vadd.s32 %v984, %v985
    %v987 = vadd.s32 %v693, %v986
    %v988 = vld [vmem:[%s1 + $0x300] sm:$0xff]
    %v989 = vld [vmem:[%s1 + $0x308] sm:$0xff]
    %v990 = vld [vmem:[%s1 + $0x310] sm:$0xff]
    %v991 = vld [vmem:[%s1 + $0x318] sm:$0xff]
    %v992 = vld [vmem:[%s1 + $0x320] sm:$0xff]
    %v993 = vld [vmem:[%s1 + $0x328] sm:$0xff]
    %v994 = vld [vmem:[%s1 + $0x330] sm:$0xff]
    %v995 = vld [vmem:[%s1 + $0x338] sm:$0xff]
    %v996 = vld [vmem:[%s1 + $0x340] sm:$0xff]
    %v997 = vld [vmem:[%s1 + $0x348] sm:$0xff]
    %v998 = vld [vmem:[%s1 + $0x350] sm:$0xff]
    %v999 = vld [vmem:[%s1 + $0x358] sm:$0xff]
    %v1000 = vld [vmem:[%s1 + $0x360] sm:$0xff]
    %v1001 = vld [vmem:[%s1 + $0x368] sm:$0xff]
    %v1002 = vld [vmem:[%s1 + $0x370] sm:$0xff]
    %v1003 = vld [vmem:[%s1 + $0x378] sm:$0xff]
    %v1004 = vld [vmem:[%s1 + $0x380] sm:$0xff]
    %v1005 = vld [vmem:[%s1 + $0x388] sm:$0xff]
    %v1006 = vld [vmem:[%s1 + $0x390] sm:$0xff]
    %v1007 = vld [vmem:[%s1 + $0x398] sm:$0xff]
    %v1008 = vld [vmem:[%s1 + $0x3a0] sm:$0xff]
    %v1009 = vld [vmem:[%s1 + $0x3a8] sm:$0xff]
    %v1010 = vld [vmem:[%s1 + $0x3b0] sm:$0xff]
    %v1011 = vld [vmem:[%s1 + $0x3b8] sm:$0xff]
    %v1012 = vld [vmem:[%s1 + $0x3c0] sm:$0xff]
    %v1013 = vld [vmem:[%s1 + $0x3c8] sm:$0xff]
    %v1014 = vld [vmem:[%s1 + $0x3d0] sm:$0xff]
    %v1015 = vld [vmem:[%s1 + $0x3d8] sm:$0xff]
    %v1016 = vld [vmem:[%s1 + $0x3e0] sm:$0xff]
    %v1017 = vld [vmem:[%s1 + $0x3e8] sm:$0xff]
    %v1018 = vld [vmem:[%s1 + $0x3f0] sm:$0xff]
    %v1019 = vld [vmem:[%s1 + $0x3f8] sm:$0xff]
    %1021 = vset.pattern.permute.xlu0 0
    %1022 = vperm.xlu0 %1021, %v988
    %v1023 = vpop.permute.xlu0 %1022
    %1026 = vset.pattern.permute.xlu0 0
    %1027 = vperm.xlu0 %1026, %v989
    %v1028 = vpop.permute.xlu0 %1027
    %1031 = vset.pattern.permute.xlu0 0
    %1032 = vperm.xlu0 %1031, %v990
    %v1033 = vpop.permute.xlu0 %1032
    %1036 = vset.pattern.permute.xlu0 0
    %1037 = vperm.xlu0 %1036, %v991
    %v1038 = vpop.permute.xlu0 %1037
    %1041 = vset.pattern.permute.xlu0 0
    %1042 = vperm.xlu0 %1041, %v992
    %v1043 = vpop.permute.xlu0 %1042
    %1046 = vset.pattern.permute.xlu0 0
    %1047 = vperm.xlu0 %1046, %v993
    %v1048 = vpop.permute.xlu0 %1047
    %1051 = vset.pattern.permute.xlu0 0
    %1052 = vperm.xlu0 %1051, %v994
    %v1053 = vpop.permute.xlu0 %1052
    %1056 = vset.pattern.permute.xlu0 0
    %1057 = vperm.xlu0 %1056, %v995
    %v1058 = vpop.permute.xlu0 %1057
    %1061 = vset.pattern.permute.xlu0 0
    %1062 = vperm.xlu0 %1061, %v996
    %v1063 = vpop.permute.xlu0 %1062
    %1066 = vset.pattern.permute.xlu0 0
    %1067 = vperm.xlu0 %1066, %v997
    %v1068 = vpop.permute.xlu0 %1067
    %1071 = vset.pattern.permute.xlu0 0
    %1072 = vperm.xlu0 %1071, %v998
    %v1073 = vpop.permute.xlu0 %1072
    %1076 = vset.pattern.permute.xlu0 0
    %1077 = vperm.xlu0 %1076, %v999
    %v1078 = vpop.permute.xlu0 %1077
    %1081 = vset.pattern.permute.xlu0 0
    %1082 = vperm.xlu0 %1081, %v1000
    %v1083 = vpop.permute.xlu0 %1082
    %1086 = vset.pattern.permute.xlu0 0
    %1087 = vperm.xlu0 %1086, %v1001
    %v1088 = vpop.permute.xlu0 %1087
    %1091 = vset.pattern.permute.xlu0 0
    %1092 = vperm.xlu0 %1091, %v1002
    %v1093 = vpop.permute.xlu0 %1092
    %1096 = vset.pattern.permute.xlu0 0
    %1097 = vperm.xlu0 %1096, %v1003
    %v1098 = vpop.permute.xlu0 %1097
    %1101 = vset.pattern.permute.xlu0 0
    %1102 = vperm.xlu0 %1101, %v1004
    %v1103 = vpop.permute.xlu0 %1102
    %1106 = vset.pattern.permute.xlu0 0
    %1107 = vperm.xlu0 %1106, %v1005
    %v1108 = vpop.permute.xlu0 %1107
    %1111 = vset.pattern.permute.xlu0 0
    %1112 = vperm.xlu0 %1111, %v1006
    %v1113 = vpop.permute.xlu0 %1112
    %1116 = vset.pattern.permute.xlu0 0
    %1117 = vperm.xlu0 %1116, %v1007
    %v1118 = vpop.permute.xlu0 %1117
    %1121 = vset.pattern.permute.xlu0 0
    %1122 = vperm.xlu0 %1121, %v1008
    %v1123 = vpop.permute.xlu0 %1122
    %1126 = vset.pattern.permute.xlu0 0
    %1127 = vperm.xlu0 %1126, %v1009
    %v1128 = vpop.permute.xlu0 %1127
    %1131 = vset.pattern.permute.xlu0 0
    %1132 = vperm.xlu0 %1131, %v1010
    %v1133 = vpop.permute.xlu0 %1132
    %1136 = vset.pattern.permute.xlu0 0
    %1137 = vperm.xlu0 %1136, %v1011
    %v1138 = vpop.permute.xlu0 %1137
    %1141 = vset.pattern.permute.xlu0 0
    %1142 = vperm.xlu0 %1141, %v1012
    %v1143 = vpop.permute.xlu0 %1142
    %1146 = vset.pattern.permute.xlu0 0
    %1147 = vperm.xlu0 %1146, %v1013
    %v1148 = vpop.permute.xlu0 %1147
    %1151 = vset.pattern.permute.xlu0 0
    %1152 = vperm.xlu0 %1151, %v1014
    %v1153 = vpop.permute.xlu0 %1152
    %1156 = vset.pattern.permute.xlu0 0
    %1157 = vperm.xlu0 %1156, %v1015
    %v1158 = vpop.permute.xlu0 %1157
    %1161 = vset.pattern.permute.xlu0 0
    %1162 = vperm.xlu0 %1161, %v1016
    %v1163 = vpop.permute.xlu0 %1162
    %1166 = vset.pattern.permute.xlu0 0
    %1167 = vperm.xlu0 %1166, %v1017
    %v1168 = vpop.permute.xlu0 %1167
    %1171 = vset.pattern.permute.xlu0 0
    %1172 = vperm.xlu0 %1171, %v1018
    %v1173 = vpop.permute.xlu0 %1172
    %1176 = vset.pattern.permute.xlu0 0
    %1177 = vperm.xlu0 %1176, %v1019
    %v1178 = vpop.permute.xlu0 %1177
    %vm1180 = vcmp.lt.f32.partialorder %v1023, %v298
    %vm1181 = vcmp.lt.f32.partialorder %v1028, %v298
    %vm1182 = vcmp.lt.f32.partialorder %v1033, %v298
    %vm1183 = vcmp.lt.f32.partialorder %v1038, %v298
    %vm1184 = vcmp.lt.f32.partialorder %v1043, %v298
    %vm1185 = vcmp.lt.f32.partialorder %v1048, %v298
    %vm1186 = vcmp.lt.f32.partialorder %v1053, %v298
    %vm1187 = vcmp.lt.f32.partialorder %v1058, %v298
    %vm1188 = vcmp.lt.f32.partialorder %v1063, %v298
    %vm1189 = vcmp.lt.f32.partialorder %v1068, %v298
    %vm1190 = vcmp.lt.f32.partialorder %v1073, %v298
    %vm1191 = vcmp.lt.f32.partialorder %v1078, %v298
    %vm1192 = vcmp.lt.f32.partialorder %v1083, %v298
    %vm1193 = vcmp.lt.f32.partialorder %v1088, %v298
    %vm1194 = vcmp.lt.f32.partialorder %v1093, %v298
    %vm1195 = vcmp.lt.f32.partialorder %v1098, %v298
    %vm1196 = vcmp.lt.f32.partialorder %v1103, %v298
    %vm1197 = vcmp.lt.f32.partialorder %v1108, %v298
    %vm1198 = vcmp.lt.f32.partialorder %v1113, %v298
    %vm1199 = vcmp.lt.f32.partialorder %v1118, %v298
    %vm1200 = vcmp.lt.f32.partialorder %v1123, %v298
    %vm1201 = vcmp.lt.f32.partialorder %v1128, %v298
    %vm1202 = vcmp.lt.f32.partialorder %v1133, %v298
    %vm1203 = vcmp.lt.f32.partialorder %v1138, %v298
    %vm1204 = vcmp.lt.f32.partialorder %v1143, %v298
    %vm1205 = vcmp.lt.f32.partialorder %v1148, %v298
    %vm1206 = vcmp.lt.f32.partialorder %v1153, %v298
    %vm1207 = vcmp.lt.f32.partialorder %v1158, %v298
    %vm1208 = vcmp.lt.f32.partialorder %v1163, %v298
    %vm1209 = vcmp.lt.f32.partialorder %v1168, %v298
    %vm1210 = vcmp.lt.f32.partialorder %v1173, %v298
    %vm1211 = vcmp.lt.f32.partialorder %v1178, %v298
    %v1212 = vsel %vm1180, 1, 0
    %v1213 = vsel %vm1181, 1, 0
    %v1214 = vsel %vm1182, 1, 0
    %v1215 = vsel %vm1183, 1, 0
    %v1216 = vsel %vm1184, 1, 0
    %v1217 = vsel %vm1185, 1, 0
    %v1218 = vsel %vm1186, 1, 0
    %v1219 = vsel %vm1187, 1, 0
    %v1220 = vsel %vm1188, 1, 0
    %v1221 = vsel %vm1189, 1, 0
    %v1222 = vsel %vm1190, 1, 0
    %v1223 = vsel %vm1191, 1, 0
    %v1224 = vsel %vm1192, 1, 0
    %v1225 = vsel %vm1193, 1, 0
    %v1226 = vsel %vm1194, 1, 0
    %v1227 = vsel %vm1195, 1, 0
    %v1228 = vsel %vm1196, 1, 0
    %v1229 = vsel %vm1197, 1, 0
    %v1230 = vsel %vm1198, 1, 0
    %v1231 = vsel %vm1199, 1, 0
    %v1232 = vsel %vm1200, 1, 0
    %v1233 = vsel %vm1201, 1, 0
    %v1234 = vsel %vm1202, 1, 0
    %v1235 = vsel %vm1203, 1, 0
    %v1236 = vsel %vm1204, 1, 0
    %v1237 = vsel %vm1205, 1, 0
    %v1238 = vsel %vm1206, 1, 0
    %v1239 = vsel %vm1207, 1, 0
    %v1240 = vsel %vm1208, 1, 0
    %v1241 = vsel %vm1209, 1, 0
    %v1242 = vsel %vm1210, 1, 0
    %v1243 = vsel %vm1211, 1, 0
    %v1244 = vadd.s32 %v1212, %v1216
    %v1245 = vadd.s32 %v1213, %v1217
    %v1246 = vadd.s32 %v1214, %v1218
    %v1247 = vadd.s32 %v1215, %v1219
    %v1248 = vadd.s32 %v1244, %v1220
    %v1249 = vadd.s32 %v1245, %v1221
    %v1250 = vadd.s32 %v1246, %v1222
    %v1251 = vadd.s32 %v1247, %v1223
    %v1252 = vadd.s32 %v1248, %v1224
    %v1253 = vadd.s32 %v1249, %v1225
    %v1254 = vadd.s32 %v1250, %v1226
    %v1255 = vadd.s32 %v1251, %v1227
    %v1256 = vadd.s32 %v1252, %v1228
    %v1257 = vadd.s32 %v1253, %v1229
    %v1258 = vadd.s32 %v1254, %v1230
    %v1259 = vadd.s32 %v1255, %v1231
    %v1260 = vadd.s32 %v1256, %v1232
    %v1261 = vadd.s32 %v1257, %v1233
    %v1262 = vadd.s32 %v1258, %v1234
    %v1263 = vadd.s32 %v1259, %v1235
    %v1264 = vadd.s32 %v1260, %v1236
    %v1265 = vadd.s32 %v1261, %v1237
    %v1266 = vadd.s32 %v1262, %v1238
    %v1267 = vadd.s32 %v1263, %v1239
    %v1268 = vadd.s32 %v1264, %v1240
    %v1269 = vadd.s32 %v1265, %v1241
    %v1270 = vadd.s32 %v1266, %v1242
    %v1271 = vadd.s32 %v1267, %v1243
    %v1272 = vadd.s32 %v1268, %v1269
    %v1273 = vadd.s32 %v1270, %v1271
    %v1274 = vadd.s32 %v1272, %v1273
    %v1275 = vrot.slane %v1274, 4
    %v1276 = vadd.s32 %v1274, %v1275
    %v1277 = vrot.slane %v1276, 2
    %v1278 = vadd.s32 %v1276, %v1277
    %v1279 = vrot.slane %v1278, 1
    %v1280 = vadd.s32 %v1278, %v1279
    %v1281 = vadd.s32 %v987, %v1280
    %v1282 = vld [vmem:[%s1 + $0x400] sm:$0xff]
    %v1283 = vld [vmem:[%s1 + $0x408] sm:$0xff]
    %v1284 = vld [vmem:[%s1 + $0x410] sm:$0xff]
    %v1285 = vld [vmem:[%s1 + $0x418] sm:$0xff]
    %v1286 = vld [vmem:[%s1 + $0x420] sm:$0xff]
    %v1287 = vld [vmem:[%s1 + $0x428] sm:$0xff]
    %v1288 = vld [vmem:[%s1 + $0x430] sm:$0xff]
    %v1289 = vld [vmem:[%s1 + $0x438] sm:$0xff]
    %v1290 = vld [vmem:[%s1 + $0x440] sm:$0xff]
    %v1291 = vld [vmem:[%s1 + $0x448] sm:$0xff]
    %v1292 = vld [vmem:[%s1 + $0x450] sm:$0xff]
    %v1293 = vld [vmem:[%s1 + $0x458] sm:$0xff]
    %v1294 = vld [vmem:[%s1 + $0x460] sm:$0xff]
    %v1295 = vld [vmem:[%s1 + $0x468] sm:$0xff]
    %v1296 = vld [vmem:[%s1 + $0x470] sm:$0xff]
    %v1297 = vld [vmem:[%s1 + $0x478] sm:$0xff]
    %v1298 = vld [vmem:[%s1 + $0x480] sm:$0xff]
    %v1299 = vld [vmem:[%s1 + $0x488] sm:$0xff]
    %v1300 = vld [vmem:[%s1 + $0x490] sm:$0xff]
    %v1301 = vld [vmem:[%s1 + $0x498] sm:$0xff]
    %v1302 = vld [vmem:[%s1 + $0x4a0] sm:$0xff]
    %v1303 = vld [vmem:[%s1 + $0x4a8] sm:$0xff]
    %v1304 = vld [vmem:[%s1 + $0x4b0] sm:$0xff]
    %v1305 = vld [vmem:[%s1 + $0x4b8] sm:$0xff]
    %v1306 = vld [vmem:[%s1 + $0x4c0] sm:$0xff]
    %v1307 = vld [vmem:[%s1 + $0x4c8] sm:$0xff]
    %v1308 = vld [vmem:[%s1 + $0x4d0] sm:$0xff]
    %v1309 = vld [vmem:[%s1 + $0x4d8] sm:$0xff]
    %v1310 = vld [vmem:[%s1 + $0x4e0] sm:$0xff]
    %v1311 = vld [vmem:[%s1 + $0x4e8] sm:$0xff]
    %v1312 = vld [vmem:[%s1 + $0x4f0] sm:$0xff]
    %v1313 = vld [vmem:[%s1 + $0x4f8] sm:$0xff]
    %1315 = vset.pattern.permute.xlu0 0
    %1316 = vperm.xlu0 %1315, %v1282
    %v1317 = vpop.permute.xlu0 %1316
    %1320 = vset.pattern.permute.xlu0 0
    %1321 = vperm.xlu0 %1320, %v1283
    %v1322 = vpop.permute.xlu0 %1321
    %1325 = vset.pattern.permute.xlu0 0
    %1326 = vperm.xlu0 %1325, %v1284
    %v1327 = vpop.permute.xlu0 %1326
    %1330 = vset.pattern.permute.xlu0 0
    %1331 = vperm.xlu0 %1330, %v1285
    %v1332 = vpop.permute.xlu0 %1331
    %1335 = vset.pattern.permute.xlu0 0
    %1336 = vperm.xlu0 %1335, %v1286
    %v1337 = vpop.permute.xlu0 %1336
    %1340 = vset.pattern.permute.xlu0 0
    %1341 = vperm.xlu0 %1340, %v1287
    %v1342 = vpop.permute.xlu0 %1341
    %1345 = vset.pattern.permute.xlu0 0
    %1346 = vperm.xlu0 %1345, %v1288
    %v1347 = vpop.permute.xlu0 %1346
    %1350 = vset.pattern.permute.xlu0 0
    %1351 = vperm.xlu0 %1350, %v1289
    %v1352 = vpop.permute.xlu0 %1351
    %1355 = vset.pattern.permute.xlu0 0
    %1356 = vperm.xlu0 %1355, %v1290
    %v1357 = vpop.permute.xlu0 %1356
    %1360 = vset.pattern.permute.xlu0 0
    %1361 = vperm.xlu0 %1360, %v1291
    %v1362 = vpop.permute.xlu0 %1361
    %1365 = vset.pattern.permute.xlu0 0
    %1366 = vperm.xlu0 %1365, %v1292
    %v1367 = vpop.permute.xlu0 %1366
    %1370 = vset.pattern.permute.xlu0 0
    %1371 = vperm.xlu0 %1370, %v1293
    %v1372 = vpop.permute.xlu0 %1371
    %1375 = vset.pattern.permute.xlu0 0
    %1376 = vperm.xlu0 %1375, %v1294
    %v1377 = vpop.permute.xlu0 %1376
    %1380 = vset.pattern.permute.xlu0 0
    %1381 = vperm.xlu0 %1380, %v1295
    %v1382 = vpop.permute.xlu0 %1381
    %1385 = vset.pattern.permute.xlu0 0
    %1386 = vperm.xlu0 %1385, %v1296
    %v1387 = vpop.permute.xlu0 %1386
    %1390 = vset.pattern.permute.xlu0 0
    %1391 = vperm.xlu0 %1390, %v1297
    %v1392 = vpop.permute.xlu0 %1391
    %1395 = vset.pattern.permute.xlu0 0
    %1396 = vperm.xlu0 %1395, %v1298
    %v1397 = vpop.permute.xlu0 %1396
    %1400 = vset.pattern.permute.xlu0 0
    %1401 = vperm.xlu0 %1400, %v1299
    %v1402 = vpop.permute.xlu0 %1401
    %1405 = vset.pattern.permute.xlu0 0
    %1406 = vperm.xlu0 %1405, %v1300
    %v1407 = vpop.permute.xlu0 %1406
    %1410 = vset.pattern.permute.xlu0 0
    %1411 = vperm.xlu0 %1410, %v1301
    %v1412 = vpop.permute.xlu0 %1411
    %1415 = vset.pattern.permute.xlu0 0
    %1416 = vperm.xlu0 %1415, %v1302
    %v1417 = vpop.permute.xlu0 %1416
    %1420 = vset.pattern.permute.xlu0 0
    %1421 = vperm.xlu0 %1420, %v1303
    %v1422 = vpop.permute.xlu0 %1421
    %1425 = vset.pattern.permute.xlu0 0
    %1426 = vperm.xlu0 %1425, %v1304
    %v1427 = vpop.permute.xlu0 %1426
    %1430 = vset.pattern.permute.xlu0 0
    %1431 = vperm.xlu0 %1430, %v1305
    %v1432 = vpop.permute.xlu0 %1431
    %1435 = vset.pattern.permute.xlu0 0
    %1436 = vperm.xlu0 %1435, %v1306
    %v1437 = vpop.permute.xlu0 %1436
    %1440 = vset.pattern.permute.xlu0 0
    %1441 = vperm.xlu0 %1440, %v1307
    %v1442 = vpop.permute.xlu0 %1441
    %1445 = vset.pattern.permute.xlu0 0
    %1446 = vperm.xlu0 %1445, %v1308
    %v1447 = vpop.permute.xlu0 %1446
    %1450 = vset.pattern.permute.xlu0 0
    %1451 = vperm.xlu0 %1450, %v1309
    %v1452 = vpop.permute.xlu0 %1451
    %1455 = vset.pattern.permute.xlu0 0
    %1456 = vperm.xlu0 %1455, %v1310
    %v1457 = vpop.permute.xlu0 %1456
    %1460 = vset.pattern.permute.xlu0 0
    %1461 = vperm.xlu0 %1460, %v1311
    %v1462 = vpop.permute.xlu0 %1461
    %1465 = vset.pattern.permute.xlu0 0
    %1466 = vperm.xlu0 %1465, %v1312
    %v1467 = vpop.permute.xlu0 %1466
    %1470 = vset.pattern.permute.xlu0 0
    %1471 = vperm.xlu0 %1470, %v1313
    %v1472 = vpop.permute.xlu0 %1471
    %vm1474 = vcmp.lt.f32.partialorder %v1317, %v298
    %vm1475 = vcmp.lt.f32.partialorder %v1322, %v298
    %vm1476 = vcmp.lt.f32.partialorder %v1327, %v298
    %vm1477 = vcmp.lt.f32.partialorder %v1332, %v298
    %vm1478 = vcmp.lt.f32.partialorder %v1337, %v298
    %vm1479 = vcmp.lt.f32.partialorder %v1342, %v298
    %vm1480 = vcmp.lt.f32.partialorder %v1347, %v298
    %vm1481 = vcmp.lt.f32.partialorder %v1352, %v298
    %vm1482 = vcmp.lt.f32.partialorder %v1357, %v298
    %vm1483 = vcmp.lt.f32.partialorder %v1362, %v298
    %vm1484 = vcmp.lt.f32.partialorder %v1367, %v298
    %vm1485 = vcmp.lt.f32.partialorder %v1372, %v298
    %vm1486 = vcmp.lt.f32.partialorder %v1377, %v298
    %vm1487 = vcmp.lt.f32.partialorder %v1382, %v298
    %vm1488 = vcmp.lt.f32.partialorder %v1387, %v298
    %vm1489 = vcmp.lt.f32.partialorder %v1392, %v298
    %vm1490 = vcmp.lt.f32.partialorder %v1397, %v298
    %vm1491 = vcmp.lt.f32.partialorder %v1402, %v298
    %vm1492 = vcmp.lt.f32.partialorder %v1407, %v298
    %vm1493 = vcmp.lt.f32.partialorder %v1412, %v298
    %vm1494 = vcmp.lt.f32.partialorder %v1417, %v298
    %vm1495 = vcmp.lt.f32.partialorder %v1422, %v298
    %vm1496 = vcmp.lt.f32.partialorder %v1427, %v298
    %vm1497 = vcmp.lt.f32.partialorder %v1432, %v298
    %vm1498 = vcmp.lt.f32.partialorder %v1437, %v298
    %vm1499 = vcmp.lt.f32.partialorder %v1442, %v298
    %vm1500 = vcmp.lt.f32.partialorder %v1447, %v298
    %vm1501 = vcmp.lt.f32.partialorder %v1452, %v298
    %vm1502 = vcmp.lt.f32.partialorder %v1457, %v298
    %vm1503 = vcmp.lt.f32.partialorder %v1462, %v298
    %vm1504 = vcmp.lt.f32.partialorder %v1467, %v298
    %vm1505 = vcmp.lt.f32.partialorder %v1472, %v298
    %v1506 = vsel %vm1474, 1, 0
    %v1507 = vsel %vm1475, 1, 0
    %v1508 = vsel %vm1476, 1, 0
    %v1509 = vsel %vm1477, 1, 0
    %v1510 = vsel %vm1478, 1, 0
    %v1511 = vsel %vm1479, 1, 0
    %v1512 = vsel %vm1480, 1, 0
    %v1513 = vsel %vm1481, 1, 0
    %v1514 = vsel %vm1482, 1, 0
    %v1515 = vsel %vm1483, 1, 0
    %v1516 = vsel %vm1484, 1, 0
    %v1517 = vsel %vm1485, 1, 0
    %v1518 = vsel %vm1486, 1, 0
    %v1519 = vsel %vm1487, 1, 0
    %v1520 = vsel %vm1488, 1, 0
    %v1521 = vsel %vm1489, 1, 0
    %v1522 = vsel %vm1490, 1, 0
    %v1523 = vsel %vm1491, 1, 0
    %v1524 = vsel %vm1492, 1, 0
    %v1525 = vsel %vm1493, 1, 0
    %v1526 = vsel %vm1494, 1, 0
    %v1527 = vsel %vm1495, 1, 0
    %v1528 = vsel %vm1496, 1, 0
    %v1529 = vsel %vm1497, 1, 0
    %v1530 = vsel %vm1498, 1, 0
    %v1531 = vsel %vm1499, 1, 0
    %v1532 = vsel %vm1500, 1, 0
    %v1533 = vsel %vm1501, 1, 0
    %v1534 = vsel %vm1502, 1, 0
    %v1535 = vsel %vm1503, 1, 0
    %v1536 = vsel %vm1504, 1, 0
    %v1537 = vsel %vm1505, 1, 0
    %v1538 = vadd.s32 %v1506, %v1510
    %v1539 = vadd.s32 %v1507, %v1511
    %v1540 = vadd.s32 %v1508, %v1512
    %v1541 = vadd.s32 %v1509, %v1513
    %v1542 = vadd.s32 %v1538, %v1514
    %v1543 = vadd.s32 %v1539, %v1515
    %v1544 = vadd.s32 %v1540, %v1516
    %v1545 = vadd.s32 %v1541, %v1517
    %v1546 = vadd.s32 %v1542, %v1518
    %v1547 = vadd.s32 %v1543, %v1519
    %v1548 = vadd.s32 %v1544, %v1520
    %v1549 = vadd.s32 %v1545, %v1521
    %v1550 = vadd.s32 %v1546, %v1522
    %v1551 = vadd.s32 %v1547, %v1523
    %v1552 = vadd.s32 %v1548, %v1524
    %v1553 = vadd.s32 %v1549, %v1525
    %v1554 = vadd.s32 %v1550, %v1526
    %v1555 = vadd.s32 %v1551, %v1527
    %v1556 = vadd.s32 %v1552, %v1528
    %v1557 = vadd.s32 %v1553, %v1529
    %v1558 = vadd.s32 %v1554, %v1530
    %v1559 = vadd.s32 %v1555, %v1531
    %v1560 = vadd.s32 %v1556, %v1532
    %v1561 = vadd.s32 %v1557, %v1533
    %v1562 = vadd.s32 %v1558, %v1534
    %v1563 = vadd.s32 %v1559, %v1535
    %v1564 = vadd.s32 %v1560, %v1536
    %v1565 = vadd.s32 %v1561, %v1537
    %v1566 = vadd.s32 %v1562, %v1563
    %v1567 = vadd.s32 %v1564, %v1565
    %v1568 = vadd.s32 %v1566, %v1567
    %v1569 = vrot.slane %v1568, 4
    %v1570 = vadd.s32 %v1568, %v1569
    %v1571 = vrot.slane %v1570, 2
    %v1572 = vadd.s32 %v1570, %v1571
    %v1573 = vrot.slane %v1572, 1
    %v1574 = vadd.s32 %v1572, %v1573
    %v1575 = vadd.s32 %v1281, %v1574
    %1576 = vrot.lane.b32.xlu0 %v1575, 1
    %v1577 = vpop.permute.xlu0 %1576
    %v1578 = vsel %vm32, 0, %v1577
    %v1579 = vsub.s32 %v1575, %v1578
    %v1580 = vlaneseq
    %v1581 = vshrl.u32 %v1580, 7
    %v1582 = vsel %vm18, %v1579, 2147483648
    %v1583 = vand.u32 %v1582, 65535
    %v1584 = vshra.s32 %v1582, 16
    %v1585 = vcvt.s32.f32 %v1583
    %v1586 = vcvt.s32.f32 %v1584
    %1587 = vmax.xlane.f32.xlu0 %v1586
    %v1588 = vpop.xlane.xlu0 %1587
    %vm1589 = vcmp.eq.f32.partialorder %v1586, %v1588
    %v1590 = vsel %vm1589, %v1585, -inf
    %1591 = vmax.xlane.f32.xlu0 %v1590
    %v1592 = vpop.xlane.xlu0 %1591
    %v1593 = vcvt.f32.s32 %v1592
    %v1594 = vcvt.f32.s32 %v1588
    %v1595 = vshll.u32 %v1594, 16
    %v1596 = vadd.s32 %v1595, %v1593
    %vm1597 = vcmp.eq.s32.totalorder %v1579, %v1596
    %v1598 = vsel %vm1597, %v16, 128
    %v1599 = vsel %vm18, %v1598, 2147483647
    %v1600 = vand.u32 %v1599, 65535
    %v1601 = vshra.s32 %v1599, 16
    %v1602 = vcvt.s32.f32 %v1600
    %v1603 = vcvt.s32.f32 %v1601
    %1604 = vmin.xlane.f32.xlu0 %v1603
    %v1605 = vpop.xlane.xlu0 %1604
    %vm1606 = vcmp.eq.f32.partialorder %v1603, %v1605
    %v1607 = vsel %vm1606, %v1602, inf
    %1608 = vmin.xlane.f32.xlu0 %v1607
    %v1609 = vpop.xlane.xlu0 %1608
    %v1610 = vcvt.f32.s32 %v1609
    %v1611 = vcvt.f32.s32 %v1605
    %v1612 = vshll.u32 %v1611, 16
    %v1613 = vadd.s32 %v1612, %v1610
    %vm1614 = vcmp.eq.s32.totalorder %v16, %v1613
    %vm1615 = vcmp.eq.s32.totalorder %v1581, 0
    %v1616 = vsel %vm1614, 1, 0
    %v1617 = vcvt.s32.f32 %v1616
    %v1618 = vsel %vm1615, 1, 0
    %vm1619 = vcmp.eq.s32.totalorder %v1618, 1
    %v1620 = vlaneseq
    %v1621 = vshrl.u32 %v1620, 7
    %v1622 = vsub.s32 0, %v1621
    %v1623 = vrot.slane %v1617, %v1622
    %v1624 = vsel %vm1619, %v1623, 0.0
    %v1625 = vsel %vm1614, 4294967295, %v1579
    %v1626 = vsel %vm18, %v1625, 2147483648
    %v1627 = vand.u32 %v1626, 65535
    %v1628 = vshra.s32 %v1626, 16
    %v1629 = vcvt.s32.f32 %v1627
    %v1630 = vcvt.s32.f32 %v1628
    %1631 = vmax.xlane.f32.xlu0 %v1630
    %v1632 = vpop.xlane.xlu0 %1631
    %vm1633 = vcmp.eq.f32.partialorder %v1630, %v1632
    %v1634 = vsel %vm1633, %v1629, -inf
    %1635 = vmax.xlane.f32.xlu0 %v1634
    %v1636 = vpop.xlane.xlu0 %1635
    %v1637 = vcvt.f32.s32 %v1636
    %v1638 = vcvt.f32.s32 %v1632
    %v1639 = vshll.u32 %v1638, 16
    %v1640 = vadd.s32 %v1639, %v1637
    %vm1641 = vcmp.eq.s32.totalorder %v1625, %v1640
    %v1642 = vsel %vm1641, %v16, 128
    %v1643 = vsel %vm18, %v1642, 2147483647
    %v1644 = vand.u32 %v1643, 65535
    %v1645 = vshra.s32 %v1643, 16
    %v1646 = vcvt.s32.f32 %v1644
    %v1647 = vcvt.s32.f32 %v1645
    %1648 = vmin.xlane.f32.xlu0 %v1647
    %v1649 = vpop.xlane.xlu0 %1648
    %vm1650 = vcmp.eq.f32.partialorder %v1647, %v1649
    %v1651 = vsel %vm1650, %v1646, inf
    %1652 = vmin.xlane.f32.xlu0 %v1651
    %v1653 = vpop.xlane.xlu0 %1652
    %v1654 = vcvt.f32.s32 %v1653
    %v1655 = vcvt.f32.s32 %v1649
    %v1656 = vshll.u32 %v1655, 16
    %v1657 = vadd.s32 %v1656, %v1654
    %vm1658 = vcmp.eq.s32.totalorder %v16, %v1657
    %vm1659 = vcmp.eq.s32.totalorder %v1581, 1
    %v1660 = vsel %vm1658, 1, 0
    %v1661 = vcvt.s32.f32 %v1660
    %v1662 = vsel %vm1659, 1, 0
    %vm1663 = vcmp.eq.s32.totalorder %v1662, 1
    %v1664 = vlaneseq
    %v1665 = vshrl.u32 %v1664, 7
    %v1666 = vsub.s32 0, %v1665
    %v1667 = vrot.slane %v1661, %v1666
    %v1668 = vsel %vm1663, %v1667, %v1624
    %v1669 = vsel %vm1658, 4294967295, %v1625
    %v1670 = vsel %vm18, %v1669, 2147483648
    %v1671 = vand.u32 %v1670, 65535
    %v1672 = vshra.s32 %v1670, 16
    %v1673 = vcvt.s32.f32 %v1671
    %v1674 = vcvt.s32.f32 %v1672
    %1675 = vmax.xlane.f32.xlu0 %v1674
    %v1676 = vpop.xlane.xlu0 %1675
    %vm1677 = vcmp.eq.f32.partialorder %v1674, %v1676
    %v1678 = vsel %vm1677, %v1673, -inf
    %1679 = vmax.xlane.f32.xlu0 %v1678
    %v1680 = vpop.xlane.xlu0 %1679
    %v1681 = vcvt.f32.s32 %v1680
    %v1682 = vcvt.f32.s32 %v1676
    %v1683 = vshll.u32 %v1682, 16
    %v1684 = vadd.s32 %v1683, %v1681
    %vm1685 = vcmp.eq.s32.totalorder %v1669, %v1684
    %v1686 = vsel %vm1685, %v16, 128
    %v1687 = vsel %vm18, %v1686, 2147483647
    %v1688 = vand.u32 %v1687, 65535
    %v1689 = vshra.s32 %v1687, 16
    %v1690 = vcvt.s32.f32 %v1688
    %v1691 = vcvt.s32.f32 %v1689
    %1692 = vmin.xlane.f32.xlu0 %v1691
    %v1693 = vpop.xlane.xlu0 %1692
    %vm1694 = vcmp.eq.f32.partialorder %v1691, %v1693
    %v1695 = vsel %vm1694, %v1690, inf
    %1696 = vmin.xlane.f32.xlu0 %v1695
    %v1697 = vpop.xlane.xlu0 %1696
    %v1698 = vcvt.f32.s32 %v1697
    %v1699 = vcvt.f32.s32 %v1693
    %v1700 = vshll.u32 %v1699, 16
    %v1701 = vadd.s32 %v1700, %v1698
    %vm1702 = vcmp.eq.s32.totalorder %v16, %v1701
    %vm1703 = vcmp.eq.s32.totalorder %v1581, 2
    %v1704 = vsel %vm1702, 1, 0
    %v1705 = vcvt.s32.f32 %v1704
    %v1706 = vsel %vm1703, 1, 0
    %vm1707 = vcmp.eq.s32.totalorder %v1706, 1
    %v1708 = vlaneseq
    %v1709 = vshrl.u32 %v1708, 7
    %v1710 = vsub.s32 0, %v1709
    %v1711 = vrot.slane %v1705, %v1710
    %v1712 = vsel %vm1707, %v1711, %v1668
    %v1713 = vsel %vm1702, 4294967295, %v1669
    %v1714 = vsel %vm18, %v1713, 2147483648
    %v1715 = vand.u32 %v1714, 65535
    %v1716 = vshra.s32 %v1714, 16
    %v1717 = vcvt.s32.f32 %v1715
    %v1718 = vcvt.s32.f32 %v1716
    %1719 = vmax.xlane.f32.xlu0 %v1718
    %v1720 = vpop.xlane.xlu0 %1719
    %vm1721 = vcmp.eq.f32.partialorder %v1718, %v1720
    %v1722 = vsel %vm1721, %v1717, -inf
    %1723 = vmax.xlane.f32.xlu0 %v1722
    %v1724 = vpop.xlane.xlu0 %1723
    %v1725 = vcvt.f32.s32 %v1724
    %v1726 = vcvt.f32.s32 %v1720
    %v1727 = vshll.u32 %v1726, 16
    %v1728 = vadd.s32 %v1727, %v1725
    %vm1729 = vcmp.eq.s32.totalorder %v1713, %v1728
    %v1730 = vsel %vm1729, %v16, 128
    %v1731 = vsel %vm18, %v1730, 2147483647
    %v1732 = vand.u32 %v1731, 65535
    %v1733 = vshra.s32 %v1731, 16
    %v1734 = vcvt.s32.f32 %v1732
    %v1735 = vcvt.s32.f32 %v1733
    %1736 = vmin.xlane.f32.xlu0 %v1735
    %v1737 = vpop.xlane.xlu0 %1736
    %vm1738 = vcmp.eq.f32.partialorder %v1735, %v1737
    %v1739 = vsel %vm1738, %v1734, inf
    %1740 = vmin.xlane.f32.xlu0 %v1739
    %v1741 = vpop.xlane.xlu0 %1740
    %v1742 = vcvt.f32.s32 %v1741
    %v1743 = vcvt.f32.s32 %v1737
    %v1744 = vshll.u32 %v1743, 16
    %v1745 = vadd.s32 %v1744, %v1742
    %vm1746 = vcmp.eq.s32.totalorder %v16, %v1745
    %vm1747 = vcmp.eq.s32.totalorder %v1581, 3
    %v1748 = vsel %vm1746, 1, 0
    %v1749 = vcvt.s32.f32 %v1748
    %v1750 = vsel %vm1747, 1, 0
    %vm1751 = vcmp.eq.s32.totalorder %v1750, 1
    %v1752 = vlaneseq
    %v1753 = vshrl.u32 %v1752, 7
    %v1754 = vsub.s32 0, %v1753
    %v1755 = vrot.slane %v1749, %v1754
    %v1756 = vsel %vm1751, %v1755, %v1712
    %v1757 = vsel %vm1746, 4294967295, %v1713
    %v1758 = vsel %vm18, %v1757, 2147483648
    %v1759 = vand.u32 %v1758, 65535
    %v1760 = vshra.s32 %v1758, 16
    %v1761 = vcvt.s32.f32 %v1759
    %v1762 = vcvt.s32.f32 %v1760
    %1763 = vmax.xlane.f32.xlu0 %v1762
    %v1764 = vpop.xlane.xlu0 %1763
    %vm1765 = vcmp.eq.f32.partialorder %v1762, %v1764
    %v1766 = vsel %vm1765, %v1761, -inf
    %1767 = vmax.xlane.f32.xlu0 %v1766
    %v1768 = vpop.xlane.xlu0 %1767
    %v1769 = vcvt.f32.s32 %v1768
    %v1770 = vcvt.f32.s32 %v1764
    %v1771 = vshll.u32 %v1770, 16
    %v1772 = vadd.s32 %v1771, %v1769
    %vm1773 = vcmp.eq.s32.totalorder %v1757, %v1772
    %v1774 = vsel %vm1773, %v16, 128
    %v1775 = vsel %vm18, %v1774, 2147483647
    %v1776 = vand.u32 %v1775, 65535
    %v1777 = vshra.s32 %v1775, 16
    %v1778 = vcvt.s32.f32 %v1776
    %v1779 = vcvt.s32.f32 %v1777
    %1780 = vmin.xlane.f32.xlu0 %v1779
    %v1781 = vpop.xlane.xlu0 %1780
    %vm1782 = vcmp.eq.f32.partialorder %v1779, %v1781
    %v1783 = vsel %vm1782, %v1778, inf
    %1784 = vmin.xlane.f32.xlu0 %v1783
    %v1785 = vpop.xlane.xlu0 %1784
    %v1786 = vcvt.f32.s32 %v1785
    %v1787 = vcvt.f32.s32 %v1781
    %v1788 = vshll.u32 %v1787, 16
    %v1789 = vadd.s32 %v1788, %v1786
    %vm1790 = vcmp.eq.s32.totalorder %v16, %v1789
    %vm1791 = vcmp.eq.s32.totalorder %v1581, 4
    %v1792 = vsel %vm1790, 1, 0
    %v1793 = vcvt.s32.f32 %v1792
    %v1794 = vsel %vm1791, 1, 0
    %vm1795 = vcmp.eq.s32.totalorder %v1794, 1
    %v1796 = vlaneseq
    %v1797 = vshrl.u32 %v1796, 7
    %v1798 = vsub.s32 0, %v1797
    %v1799 = vrot.slane %v1793, %v1798
    %v1800 = vsel %vm1795, %v1799, %v1756
    %v1801 = vsel %vm1790, 4294967295, %v1757
    %v1802 = vsel %vm18, %v1801, 2147483648
    %v1803 = vand.u32 %v1802, 65535
    %v1804 = vshra.s32 %v1802, 16
    %v1805 = vcvt.s32.f32 %v1803
    %v1806 = vcvt.s32.f32 %v1804
    %1807 = vmax.xlane.f32.xlu0 %v1806
    %v1808 = vpop.xlane.xlu0 %1807
    %vm1809 = vcmp.eq.f32.partialorder %v1806, %v1808
    %v1810 = vsel %vm1809, %v1805, -inf
    %1811 = vmax.xlane.f32.xlu0 %v1810
    %v1812 = vpop.xlane.xlu0 %1811
    %v1813 = vcvt.f32.s32 %v1812
    %v1814 = vcvt.f32.s32 %v1808
    %v1815 = vshll.u32 %v1814, 16
    %v1816 = vadd.s32 %v1815, %v1813
    %vm1817 = vcmp.eq.s32.totalorder %v1801, %v1816
    %v1818 = vsel %vm1817, %v16, 128
    %v1819 = vsel %vm18, %v1818, 2147483647
    %v1820 = vand.u32 %v1819, 65535
    %v1821 = vshra.s32 %v1819, 16
    %v1822 = vcvt.s32.f32 %v1820
    %v1823 = vcvt.s32.f32 %v1821
    %1824 = vmin.xlane.f32.xlu0 %v1823
    %v1825 = vpop.xlane.xlu0 %1824
    %vm1826 = vcmp.eq.f32.partialorder %v1823, %v1825
    %v1827 = vsel %vm1826, %v1822, inf
    %1828 = vmin.xlane.f32.xlu0 %v1827
    %v1829 = vpop.xlane.xlu0 %1828
    %v1830 = vcvt.f32.s32 %v1829
    %v1831 = vcvt.f32.s32 %v1825
    %v1832 = vshll.u32 %v1831, 16
    %v1833 = vadd.s32 %v1832, %v1830
    %vm1834 = vcmp.eq.s32.totalorder %v16, %v1833
    %vm1835 = vcmp.eq.s32.totalorder %v1581, 5
    %v1836 = vsel %vm1834, 1, 0
    %v1837 = vcvt.s32.f32 %v1836
    %v1838 = vsel %vm1835, 1, 0
    %vm1839 = vcmp.eq.s32.totalorder %v1838, 1
    %v1840 = vlaneseq
    %v1841 = vshrl.u32 %v1840, 7
    %v1842 = vsub.s32 0, %v1841
    %v1843 = vrot.slane %v1837, %v1842
    %v1844 = vsel %vm1839, %v1843, %v1800
    %v1845 = vsel %vm1834, 4294967295, %v1801
    %v1846 = vsel %vm18, %v1845, 2147483648
    %v1847 = vand.u32 %v1846, 65535
    %v1848 = vshra.s32 %v1846, 16
    %v1849 = vcvt.s32.f32 %v1847
    %v1850 = vcvt.s32.f32 %v1848
    %1851 = vmax.xlane.f32.xlu0 %v1850
    %v1852 = vpop.xlane.xlu0 %1851
    %vm1853 = vcmp.eq.f32.partialorder %v1850, %v1852
    %v1854 = vsel %vm1853, %v1849, -inf
    %1855 = vmax.xlane.f32.xlu0 %v1854
    %v1856 = vpop.xlane.xlu0 %1855
    %v1857 = vcvt.f32.s32 %v1856
    %v1858 = vcvt.f32.s32 %v1852
    %v1859 = vshll.u32 %v1858, 16
    %v1860 = vadd.s32 %v1859, %v1857
    %vm1861 = vcmp.eq.s32.totalorder %v1845, %v1860
    %v1862 = vsel %vm1861, %v16, 128
    %v1863 = vsel %vm18, %v1862, 2147483647
    %v1864 = vand.u32 %v1863, 65535
    %v1865 = vshra.s32 %v1863, 16
    %v1866 = vcvt.s32.f32 %v1864
    %v1867 = vcvt.s32.f32 %v1865
    %1868 = vmin.xlane.f32.xlu0 %v1867
    %v1869 = vpop.xlane.xlu0 %1868
    %vm1870 = vcmp.eq.f32.partialorder %v1867, %v1869
    %v1871 = vsel %vm1870, %v1866, inf
    %1872 = vmin.xlane.f32.xlu0 %v1871
    %v1873 = vpop.xlane.xlu0 %1872
    %v1874 = vcvt.f32.s32 %v1873
    %v1875 = vcvt.f32.s32 %v1869
    %v1876 = vshll.u32 %v1875, 16
    %v1877 = vadd.s32 %v1876, %v1874
    %vm1878 = vcmp.eq.s32.totalorder %v16, %v1877
    %vm1879 = vcmp.eq.s32.totalorder %v1581, 6
    %v1880 = vsel %vm1878, 1, 0
    %v1881 = vcvt.s32.f32 %v1880
    %v1882 = vsel %vm1879, 1, 0
    %vm1883 = vcmp.eq.s32.totalorder %v1882, 1
    %v1884 = vlaneseq
    %v1885 = vshrl.u32 %v1884, 7
    %v1886 = vsub.s32 0, %v1885
    %v1887 = vrot.slane %v1881, %v1886
    %v1888 = vsel %vm1883, %v1887, %v1844
    %v1889 = vsel %vm1878, 4294967295, %v1845
    %v1890 = vsel %vm18, %v1889, 2147483648
    %v1891 = vand.u32 %v1890, 65535
    %v1892 = vshra.s32 %v1890, 16
    %v1893 = vcvt.s32.f32 %v1891
    %v1894 = vcvt.s32.f32 %v1892
    %1895 = vmax.xlane.f32.xlu0 %v1894
    %v1896 = vpop.xlane.xlu0 %1895
    %vm1897 = vcmp.eq.f32.partialorder %v1894, %v1896
    %v1898 = vsel %vm1897, %v1893, -inf
    %1899 = vmax.xlane.f32.xlu0 %v1898
    %v1900 = vpop.xlane.xlu0 %1899
    %v1901 = vcvt.f32.s32 %v1900
    %v1902 = vcvt.f32.s32 %v1896
    %v1903 = vshll.u32 %v1902, 16
    %v1904 = vadd.s32 %v1903, %v1901
    %vm1905 = vcmp.eq.s32.totalorder %v1889, %v1904
    %v1906 = vsel %vm1905, %v16, 128
    %v1907 = vsel %vm18, %v1906, 2147483647
    %v1908 = vand.u32 %v1907, 65535
    %v1909 = vshra.s32 %v1907, 16
    %v1910 = vcvt.s32.f32 %v1908
    %v1911 = vcvt.s32.f32 %v1909
    %1912 = vmin.xlane.f32.xlu0 %v1911
    %v1913 = vpop.xlane.xlu0 %1912
    %vm1914 = vcmp.eq.f32.partialorder %v1911, %v1913
    %v1915 = vsel %vm1914, %v1910, inf
    %1916 = vmin.xlane.f32.xlu0 %v1915
    %v1917 = vpop.xlane.xlu0 %1916
    %v1918 = vcvt.f32.s32 %v1917
    %v1919 = vcvt.f32.s32 %v1913
    %v1920 = vshll.u32 %v1919, 16
    %v1921 = vadd.s32 %v1920, %v1918
    %vm1922 = vcmp.eq.s32.totalorder %v16, %v1921
    %vm1923 = vcmp.eq.s32.totalorder %v1581, 7
    %v1924 = vsel %vm1922, 1, 0
    %v1925 = vcvt.s32.f32 %v1924
    %v1926 = vsel %vm1923, 1, 0
    %vm1927 = vcmp.eq.s32.totalorder %v1926, 1
    %v1928 = vlaneseq
    %v1929 = vshrl.u32 %v1928, 7
    %v1930 = vsub.s32 0, %v1929
    %v1931 = vrot.slane %v1925, %v1930
    %v1932 = vsel %vm1927, %v1931, %v1888
    %v1933 = vld [vmem:[%s2] sm:$0xff]
    %v1934 = vld [vmem:[%s2 + $0x8] sm:$0xff]
    %v1935 = vld [vmem:[%s2 + $0x10] sm:$0xff]
    %v1936 = vld [vmem:[%s2 + $0x18] sm:$0xff]
    %v1937 = vld [vmem:[%s2 + $0x20] sm:$0xff]
    %v1938 = vld [vmem:[%s2 + $0x28] sm:$0xff]
    %v1939 = vld [vmem:[%s2 + $0x30] sm:$0xff]
    %v1940 = vld [vmem:[%s2 + $0x38] sm:$0xff]
    %v1941 = vld [vmem:[%s2 + $0x40] sm:$0xff]
    %v1942 = vld [vmem:[%s2 + $0x48] sm:$0xff]
    %v1943 = vld [vmem:[%s2 + $0x50] sm:$0xff]
    %v1944 = vld [vmem:[%s2 + $0x58] sm:$0xff]
    %v1945 = vld [vmem:[%s2 + $0x60] sm:$0xff]
    %v1946 = vld [vmem:[%s2 + $0x68] sm:$0xff]
    %v1947 = vld [vmem:[%s2 + $0x70] sm:$0xff]
    %v1948 = vld [vmem:[%s2 + $0x78] sm:$0xff]
    %1949 = vmatprep.subr.mxu0 0.0
    %v1950 = vand.u32 %v1933, 4294901760
    %1951 = vmatpush1.msra.mxu0 %v1950
    %1952 = vmatprep.subr.mxu0 0.0
    %v1953 = vand.u32 %v1934, 4294901760
    %1954 = vmatpush1.msra.mxu0 %v1953
    %1955 = vmatprep.subr.mxu0 0.0
    %v1956 = vand.u32 %v1935, 4294901760
    %1957 = vmatpush1.msra.mxu0 %v1956
    %1958 = vmatprep.subr.mxu0 0.0
    %v1959 = vand.u32 %v1936, 4294901760
    %1960 = vmatpush1.msra.mxu0 %v1959
    %1961 = vmatprep.subr.mxu0 0.0
    %v1962 = vand.u32 %v1937, 4294901760
    %1963 = vmatpush1.msra.mxu0 %v1962
    %1964 = vmatprep.subr.mxu0 0.0
    %v1965 = vand.u32 %v1938, 4294901760
    %1966 = vmatpush1.msra.mxu0 %v1965
    %1967 = vmatprep.subr.mxu0 0.0
    %v1968 = vand.u32 %v1939, 4294901760
    %1969 = vmatpush1.msra.mxu0 %v1968
    %1970 = vmatprep.subr.mxu0 0.0
    %v1971 = vand.u32 %v1940, 4294901760
    %1972 = vmatpush1.msra.mxu0 %v1971
    %1973 = vmatprep.subr.mxu0 0.0
    %v1974 = vand.u32 %v1941, 4294901760
    %1975 = vmatpush1.msra.mxu0 %v1974
    %1976 = vmatprep.subr.mxu0 0.0
    %v1977 = vand.u32 %v1942, 4294901760
    %1978 = vmatpush1.msra.mxu0 %v1977
    %1979 = vmatprep.subr.mxu0 0.0
    %v1980 = vand.u32 %v1943, 4294901760
    %1981 = vmatpush1.msra.mxu0 %v1980
    %1982 = vmatprep.subr.mxu0 0.0
    %v1983 = vand.u32 %v1944, 4294901760
    %1984 = vmatpush1.msra.mxu0 %v1983
    %1985 = vmatprep.subr.mxu0 0.0
    %v1986 = vand.u32 %v1945, 4294901760
    %1987 = vmatpush1.msra.mxu0 %v1986
    %1988 = vmatprep.subr.mxu0 0.0
    %v1989 = vand.u32 %v1946, 4294901760
    %1990 = vmatpush1.msra.mxu0 %v1989
    %1991 = vmatprep.subr.mxu0 0.0
    %v1992 = vand.u32 %v1947, 4294901760
    %1993 = vmatpush1.msra.mxu0 %v1992
    %1994 = vmatprep.subr.mxu0 0.0
    %v1995 = vand.u32 %v1948, 4294901760
    %1996 = vmatpush1.msra.mxu0 %v1995
    %1997 = vmatprep.subr.mxu0 0.0
    %1998 = vmatpush1.msra.mxu0 0.0
    %1999 = vmatprep.subr.mxu0 0.0
    %2000 = vmatpush1.msra.mxu0 0.0
    %2001 = vmatprep.subr.mxu0 0.0
    %2002 = vmatpush1.msra.mxu0 0.0
    %2003 = vmatprep.subr.mxu0 0.0
    %2004 = vmatpush1.msra.mxu0 0.0
    %2005 = vmatprep.subr.mxu0 0.0
    %2006 = vmatpush1.msra.mxu0 0.0
    %2007 = vmatprep.subr.mxu0 0.0
    %2008 = vmatpush1.msra.mxu0 0.0
    %2009 = vmatprep.subr.mxu0 0.0
    %2010 = vmatpush1.msra.mxu0 0.0
    %2011 = vmatprep.subr.mxu0 0.0
    %2012 = vmatpush1.msra.mxu0 0.0
    %2013 = vmatprep.subr.mxu0 0.0
    %2014 = vmatpush1.msra.mxu0 0.0
    %2015 = vmatprep.subr.mxu0 0.0
    %2016 = vmatpush1.msra.mxu0 0.0
    %2017 = vmatprep.subr.mxu0 0.0
    %2018 = vmatpush1.msra.mxu0 0.0
    %2019 = vmatprep.subr.mxu0 0.0
    %2020 = vmatpush1.msra.mxu0 0.0
    %2021 = vmatprep.subr.mxu0 0.0
    %2022 = vmatpush1.msra.mxu0 0.0
    %2023 = vmatprep.subr.mxu0 0.0
    %2024 = vmatpush1.msra.mxu0 0.0
    %2025 = vmatprep.subr.mxu0 0.0
    %2026 = vmatpush1.msra.mxu0 0.0
    %2027 = vmatprep.subr.mxu0 0.0
    %2028 = vmatpush1.msra.mxu0 0.0
    %2029 = vmatprep.mubr.f32.mxu0 0.0
    %v2030 = vand.u32 %v1932, 4294901760
    %v2031 = vsub.f32 %v1932, %v2030
    %v2032 = vand.u32 %v2031, 4294901760
    %v2033 = vsub.f32 %v2031, %v2032
    %v2034 = vand.u32 %v2033, 4294901760
    %2035 = vmatmul.mubr.f32.gmra.mrb[0].mxu0 %v2034
    %v2036 = vpop.f32.mrb[0].mxu0
    %v2037 = vadd.f32 0.0, %v2036
    %v2038 = vpop.f32.mrb[0].mxu0
    %2039 = vdwg.mxu0
    %2040 = vmatprep.subr.mxu0 0.0
    %v2041 = vand.u32 %v1933, 4294901760
    %v2042 = vsub.f32 %v1933, %v2041
    %v2043 = vand.u32 %v2042, 4294901760
    %v2044 = vsub.f32 %v2042, %v2043
    %v2045 = vand.u32 %v2044, 4294901760
    %2046 = vmatpush1.msra.mxu0 %v2045
    %2047 = vmatprep.subr.mxu0 0.0
    %v2048 = vand.u32 %v1934, 4294901760
    %v2049 = vsub.f32 %v1934, %v2048
    %v2050 = vand.u32 %v2049, 4294901760
    %v2051 = vsub.f32 %v2049, %v2050
    %v2052 = vand.u32 %v2051, 4294901760
    %2053 = vmatpush1.msra.mxu0 %v2052
    %2054 = vmatprep.subr.mxu0 0.0
    %v2055 = vand.u32 %v1935, 4294901760
    %v2056 = vsub.f32 %v1935, %v2055
    %v2057 = vand.u32 %v2056, 4294901760
    %v2058 = vsub.f32 %v2056, %v2057
    %v2059 = vand.u32 %v2058, 4294901760
    %2060 = vmatpush1.msra.mxu0 %v2059
    %2061 = vmatprep.subr.mxu0 0.0
    %v2062 = vand.u32 %v1936, 4294901760
    %v2063 = vsub.f32 %v1936, %v2062
    %v2064 = vand.u32 %v2063, 4294901760
    %v2065 = vsub.f32 %v2063, %v2064
    %v2066 = vand.u32 %v2065, 4294901760
    %2067 = vmatpush1.msra.mxu0 %v2066
    %2068 = vmatprep.subr.mxu0 0.0
    %v2069 = vand.u32 %v1937, 4294901760
    %v2070 = vsub.f32 %v1937, %v2069
    %v2071 = vand.u32 %v2070, 4294901760
    %v2072 = vsub.f32 %v2070, %v2071
    %v2073 = vand.u32 %v2072, 4294901760
    %2074 = vmatpush1.msra.mxu0 %v2073
    %2075 = vmatprep.subr.mxu0 0.0
    %v2076 = vand.u32 %v1938, 4294901760
    %v2077 = vsub.f32 %v1938, %v2076
    %v2078 = vand.u32 %v2077, 4294901760
    %v2079 = vsub.f32 %v2077, %v2078
    %v2080 = vand.u32 %v2079, 4294901760
    %2081 = vmatpush1.msra.mxu0 %v2080
    %2082 = vmatprep.subr.mxu0 0.0
    %v2083 = vand.u32 %v1939, 4294901760
    %v2084 = vsub.f32 %v1939, %v2083
    %v2085 = vand.u32 %v2084, 4294901760
    %v2086 = vsub.f32 %v2084, %v2085
    %v2087 = vand.u32 %v2086, 4294901760
    %2088 = vmatpush1.msra.mxu0 %v2087
    %2089 = vmatprep.subr.mxu0 0.0
    %v2090 = vand.u32 %v1940, 4294901760
    %v2091 = vsub.f32 %v1940, %v2090
    %v2092 = vand.u32 %v2091, 4294901760
    %v2093 = vsub.f32 %v2091, %v2092
    %v2094 = vand.u32 %v2093, 4294901760
    %2095 = vmatpush1.msra.mxu0 %v2094
    %2096 = vmatprep.subr.mxu0 0.0
    %v2097 = vand.u32 %v1941, 4294901760
    %v2098 = vsub.f32 %v1941, %v2097
    %v2099 = vand.u32 %v2098, 4294901760
    %v2100 = vsub.f32 %v2098, %v2099
    %v2101 = vand.u32 %v2100, 4294901760
    %2102 = vmatpush1.msra.mxu0 %v2101
    %2103 = vmatprep.subr.mxu0 0.0
    %v2104 = vand.u32 %v1942, 4294901760
    %v2105 = vsub.f32 %v1942, %v2104
    %v2106 = vand.u32 %v2105, 4294901760
    %v2107 = vsub.f32 %v2105, %v2106
    %v2108 = vand.u32 %v2107, 4294901760
    %2109 = vmatpush1.msra.mxu0 %v2108
    %2110 = vmatprep.subr.mxu0 0.0
    %v2111 = vand.u32 %v1943, 4294901760
    %v2112 = vsub.f32 %v1943, %v2111
    %v2113 = vand.u32 %v2112, 4294901760
    %v2114 = vsub.f32 %v2112, %v2113
    %v2115 = vand.u32 %v2114, 4294901760
    %2116 = vmatpush1.msra.mxu0 %v2115
    %2117 = vmatprep.subr.mxu0 0.0
    %v2118 = vand.u32 %v1944, 4294901760
    %v2119 = vsub.f32 %v1944, %v2118
    %v2120 = vand.u32 %v2119, 4294901760
    %v2121 = vsub.f32 %v2119, %v2120
    %v2122 = vand.u32 %v2121, 4294901760
    %2123 = vmatpush1.msra.mxu0 %v2122
    %2124 = vmatprep.subr.mxu0 0.0
    %v2125 = vand.u32 %v1945, 4294901760
    %v2126 = vsub.f32 %v1945, %v2125
    %v2127 = vand.u32 %v2126, 4294901760
    %v2128 = vsub.f32 %v2126, %v2127
    %v2129 = vand.u32 %v2128, 4294901760
    %2130 = vmatpush1.msra.mxu0 %v2129
    %2131 = vmatprep.subr.mxu0 0.0
    %v2132 = vand.u32 %v1946, 4294901760
    %v2133 = vsub.f32 %v1946, %v2132
    %v2134 = vand.u32 %v2133, 4294901760
    %v2135 = vsub.f32 %v2133, %v2134
    %v2136 = vand.u32 %v2135, 4294901760
    %2137 = vmatpush1.msra.mxu0 %v2136
    %2138 = vmatprep.subr.mxu0 0.0
    %v2139 = vand.u32 %v1947, 4294901760
    %v2140 = vsub.f32 %v1947, %v2139
    %v2141 = vand.u32 %v2140, 4294901760
    %v2142 = vsub.f32 %v2140, %v2141
    %v2143 = vand.u32 %v2142, 4294901760
    %2144 = vmatpush1.msra.mxu0 %v2143
    %2145 = vmatprep.subr.mxu0 0.0
    %v2146 = vand.u32 %v1948, 4294901760
    %v2147 = vsub.f32 %v1948, %v2146
    %v2148 = vand.u32 %v2147, 4294901760
    %v2149 = vsub.f32 %v2147, %v2148
    %v2150 = vand.u32 %v2149, 4294901760
    %2151 = vmatpush1.msra.mxu0 %v2150
    %2152 = vmatprep.subr.mxu0 0.0
    %2153 = vmatpush1.msra.mxu0 0.0
    %2154 = vmatprep.subr.mxu0 0.0
    %2155 = vmatpush1.msra.mxu0 0.0
    %2156 = vmatprep.subr.mxu0 0.0
    %2157 = vmatpush1.msra.mxu0 0.0
    %2158 = vmatprep.subr.mxu0 0.0
    %2159 = vmatpush1.msra.mxu0 0.0
    %2160 = vmatprep.subr.mxu0 0.0
    %2161 = vmatpush1.msra.mxu0 0.0
    %2162 = vmatprep.subr.mxu0 0.0
    %2163 = vmatpush1.msra.mxu0 0.0
    %2164 = vmatprep.subr.mxu0 0.0
    %2165 = vmatpush1.msra.mxu0 0.0
    %2166 = vmatprep.subr.mxu0 0.0
    %2167 = vmatpush1.msra.mxu0 0.0
    %2168 = vmatprep.subr.mxu0 0.0
    %2169 = vmatpush1.msra.mxu0 0.0
    %2170 = vmatprep.subr.mxu0 0.0
    %2171 = vmatpush1.msra.mxu0 0.0
    %2172 = vmatprep.subr.mxu0 0.0
    %2173 = vmatpush1.msra.mxu0 0.0
    %2174 = vmatprep.subr.mxu0 0.0
    %2175 = vmatpush1.msra.mxu0 0.0
    %2176 = vmatprep.subr.mxu0 0.0
    %2177 = vmatpush1.msra.mxu0 0.0
    %2178 = vmatprep.subr.mxu0 0.0
    %2179 = vmatpush1.msra.mxu0 0.0
    %2180 = vmatprep.subr.mxu0 0.0
    %2181 = vmatpush1.msra.mxu0 0.0
    %2182 = vmatprep.subr.mxu0 0.0
    %2183 = vmatpush1.msra.mxu0 0.0
    %2184 = vmatprep.mubr.f32.mxu0 0.0
    %v2185 = vand.u32 %v1932, 4294901760
    %2186 = vmatmul.mubr.f32.gmra.mrb[0].mxu0 %v2185
    %v2187 = vpop.f32.mrb[0].mxu0
    %v2188 = vadd.f32 %v2037, %v2187
    %v2189 = vpop.f32.mrb[0].mxu0
    %2190 = vdwg.mxu0
    %2191 = vmatprep.subr.mxu0 0.0
    %v2192 = vand.u32 %v1933, 4294901760
    %v2193 = vsub.f32 %v1933, %v2192
    %2194 = vmatpush1.msra.mxu0 %v2193
    %2195 = vmatprep.subr.mxu0 0.0
    %v2196 = vand.u32 %v1934, 4294901760
    %v2197 = vsub.f32 %v1934, %v2196
    %2198 = vmatpush1.msra.mxu0 %v2197
    %2199 = vmatprep.subr.mxu0 0.0
    %v2200 = vand.u32 %v1935, 4294901760
    %v2201 = vsub.f32 %v1935, %v2200
    %2202 = vmatpush1.msra.mxu0 %v2201
    %2203 = vmatprep.subr.mxu0 0.0
    %v2204 = vand.u32 %v1936, 4294901760
    %v2205 = vsub.f32 %v1936, %v2204
    %2206 = vmatpush1.msra.mxu0 %v2205
    %2207 = vmatprep.subr.mxu0 0.0
    %v2208 = vand.u32 %v1937, 4294901760
    %v2209 = vsub.f32 %v1937, %v2208
    %2210 = vmatpush1.msra.mxu0 %v2209
    %2211 = vmatprep.subr.mxu0 0.0
    %v2212 = vand.u32 %v1938, 4294901760
    %v2213 = vsub.f32 %v1938, %v2212
    %2214 = vmatpush1.msra.mxu0 %v2213
    %2215 = vmatprep.subr.mxu0 0.0
    %v2216 = vand.u32 %v1939, 4294901760
    %v2217 = vsub.f32 %v1939, %v2216
    %2218 = vmatpush1.msra.mxu0 %v2217
    %2219 = vmatprep.subr.mxu0 0.0
    %v2220 = vand.u32 %v1940, 4294901760
    %v2221 = vsub.f32 %v1940, %v2220
    %2222 = vmatpush1.msra.mxu0 %v2221
    %2223 = vmatprep.subr.mxu0 0.0
    %v2224 = vand.u32 %v1941, 4294901760
    %v2225 = vsub.f32 %v1941, %v2224
    %2226 = vmatpush1.msra.mxu0 %v2225
    %2227 = vmatprep.subr.mxu0 0.0
    %v2228 = vand.u32 %v1942, 4294901760
    %v2229 = vsub.f32 %v1942, %v2228
    %2230 = vmatpush1.msra.mxu0 %v2229
    %2231 = vmatprep.subr.mxu0 0.0
    %v2232 = vand.u32 %v1943, 4294901760
    %v2233 = vsub.f32 %v1943, %v2232
    %2234 = vmatpush1.msra.mxu0 %v2233
    %2235 = vmatprep.subr.mxu0 0.0
    %v2236 = vand.u32 %v1944, 4294901760
    %v2237 = vsub.f32 %v1944, %v2236
    %2238 = vmatpush1.msra.mxu0 %v2237
    %2239 = vmatprep.subr.mxu0 0.0
    %v2240 = vand.u32 %v1945, 4294901760
    %v2241 = vsub.f32 %v1945, %v2240
    %2242 = vmatpush1.msra.mxu0 %v2241
    %2243 = vmatprep.subr.mxu0 0.0
    %v2244 = vand.u32 %v1946, 4294901760
    %v2245 = vsub.f32 %v1946, %v2244
    %2246 = vmatpush1.msra.mxu0 %v2245
    %2247 = vmatprep.subr.mxu0 0.0
    %v2248 = vand.u32 %v1947, 4294901760
    %v2249 = vsub.f32 %v1947, %v2248
    %2250 = vmatpush1.msra.mxu0 %v2249
    %2251 = vmatprep.subr.mxu0 0.0
    %v2252 = vand.u32 %v1948, 4294901760
    %v2253 = vsub.f32 %v1948, %v2252
    %2254 = vmatpush1.msra.mxu0 %v2253
    %2255 = vmatprep.subr.mxu0 0.0
    %2256 = vmatpush1.msra.mxu0 0.0
    %2257 = vmatprep.subr.mxu0 0.0
    %2258 = vmatpush1.msra.mxu0 0.0
    %2259 = vmatprep.subr.mxu0 0.0
    %2260 = vmatpush1.msra.mxu0 0.0
    %2261 = vmatprep.subr.mxu0 0.0
    %2262 = vmatpush1.msra.mxu0 0.0
    %2263 = vmatprep.subr.mxu0 0.0
    %2264 = vmatpush1.msra.mxu0 0.0
    %2265 = vmatprep.subr.mxu0 0.0
    %2266 = vmatpush1.msra.mxu0 0.0
    %2267 = vmatprep.subr.mxu0 0.0
    %2268 = vmatpush1.msra.mxu0 0.0
    %2269 = vmatprep.subr.mxu0 0.0
    %2270 = vmatpush1.msra.mxu0 0.0
    %2271 = vmatprep.subr.mxu0 0.0
    %2272 = vmatpush1.msra.mxu0 0.0
    %2273 = vmatprep.subr.mxu0 0.0
    %2274 = vmatpush1.msra.mxu0 0.0
    %2275 = vmatprep.subr.mxu0 0.0
    %2276 = vmatpush1.msra.mxu0 0.0
    %2277 = vmatprep.subr.mxu0 0.0
    %2278 = vmatpush1.msra.mxu0 0.0
    %2279 = vmatprep.subr.mxu0 0.0
    %2280 = vmatpush1.msra.mxu0 0.0
    %2281 = vmatprep.subr.mxu0 0.0
    %2282 = vmatpush1.msra.mxu0 0.0
    %2283 = vmatprep.subr.mxu0 0.0
    %2284 = vmatpush1.msra.mxu0 0.0
    %2285 = vmatprep.subr.mxu0 0.0
    %2286 = vmatpush1.msra.mxu0 0.0
    %2287 = vmatprep.mubr.f32.mxu0 0.0
    %v2288 = vand.u32 %v1932, 4294901760
    %v2289 = vsub.f32 %v1932, %v2288
    %2290 = vmatmul.mubr.f32.gmra.mrb[0].mxu0 %v2289
    %v2291 = vpop.f32.mrb[0].mxu0
    %v2292 = vadd.f32 %v2188, %v2291
    %v2293 = vpop.f32.mrb[0].mxu0
    %2294 = vdwg.mxu0
    %2295 = vmatprep.subr.mxu0 0.0
    %v2296 = vand.u32 %v1933, 4294901760
    %2297 = vmatpush1.msra.mxu0 %v2296
    %2298 = vmatprep.subr.mxu0 0.0
    %v2299 = vand.u32 %v1934, 4294901760
    %2300 = vmatpush1.msra.mxu0 %v2299
    %2301 = vmatprep.subr.mxu0 0.0
    %v2302 = vand.u32 %v1935, 4294901760
    %2303 = vmatpush1.msra.mxu0 %v2302
    %2304 = vmatprep.subr.mxu0 0.0
    %v2305 = vand.u32 %v1936, 4294901760
    %2306 = vmatpush1.msra.mxu0 %v2305
    %2307 = vmatprep.subr.mxu0 0.0
    %v2308 = vand.u32 %v1937, 4294901760
    %2309 = vmatpush1.msra.mxu0 %v2308
    %2310 = vmatprep.subr.mxu0 0.0
    %v2311 = vand.u32 %v1938, 4294901760
    %2312 = vmatpush1.msra.mxu0 %v2311
    %2313 = vmatprep.subr.mxu0 0.0
    %v2314 = vand.u32 %v1939, 4294901760
    %2315 = vmatpush1.msra.mxu0 %v2314
    %2316 = vmatprep.subr.mxu0 0.0
    %v2317 = vand.u32 %v1940, 4294901760
    %2318 = vmatpush1.msra.mxu0 %v2317
    %2319 = vmatprep.subr.mxu0 0.0
    %v2320 = vand.u32 %v1941, 4294901760
    %2321 = vmatpush1.msra.mxu0 %v2320
    %2322 = vmatprep.subr.mxu0 0.0
    %v2323 = vand.u32 %v1942, 4294901760
    %2324 = vmatpush1.msra.mxu0 %v2323
    %2325 = vmatprep.subr.mxu0 0.0
    %v2326 = vand.u32 %v1943, 4294901760
    %2327 = vmatpush1.msra.mxu0 %v2326
    %2328 = vmatprep.subr.mxu0 0.0
    %v2329 = vand.u32 %v1944, 4294901760
    %2330 = vmatpush1.msra.mxu0 %v2329
    %2331 = vmatprep.subr.mxu0 0.0
    %v2332 = vand.u32 %v1945, 4294901760
    %2333 = vmatpush1.msra.mxu0 %v2332
    %2334 = vmatprep.subr.mxu0 0.0
    %v2335 = vand.u32 %v1946, 4294901760
    %2336 = vmatpush1.msra.mxu0 %v2335
    %2337 = vmatprep.subr.mxu0 0.0
    %v2338 = vand.u32 %v1947, 4294901760
    %2339 = vmatpush1.msra.mxu0 %v2338
    %2340 = vmatprep.subr.mxu0 0.0
    %v2341 = vand.u32 %v1948, 4294901760
    %2342 = vmatpush1.msra.mxu0 %v2341
    %2343 = vmatprep.subr.mxu0 0.0
    %2344 = vmatpush1.msra.mxu0 0.0
    %2345 = vmatprep.subr.mxu0 0.0
    %2346 = vmatpush1.msra.mxu0 0.0
    %2347 = vmatprep.subr.mxu0 0.0
    %2348 = vmatpush1.msra.mxu0 0.0
    %2349 = vmatprep.subr.mxu0 0.0
    %2350 = vmatpush1.msra.mxu0 0.0
    %2351 = vmatprep.subr.mxu0 0.0
    %2352 = vmatpush1.msra.mxu0 0.0
    %2353 = vmatprep.subr.mxu0 0.0
    %2354 = vmatpush1.msra.mxu0 0.0
    %2355 = vmatprep.subr.mxu0 0.0
    %2356 = vmatpush1.msra.mxu0 0.0
    %2357 = vmatprep.subr.mxu0 0.0
    %2358 = vmatpush1.msra.mxu0 0.0
    %2359 = vmatprep.subr.mxu0 0.0
    %2360 = vmatpush1.msra.mxu0 0.0
    %2361 = vmatprep.subr.mxu0 0.0
    %2362 = vmatpush1.msra.mxu0 0.0
    %2363 = vmatprep.subr.mxu0 0.0
    %2364 = vmatpush1.msra.mxu0 0.0
    %2365 = vmatprep.subr.mxu0 0.0
    %2366 = vmatpush1.msra.mxu0 0.0
    %2367 = vmatprep.subr.mxu0 0.0
    %2368 = vmatpush1.msra.mxu0 0.0
    %2369 = vmatprep.subr.mxu0 0.0
    %2370 = vmatpush1.msra.mxu0 0.0
    %2371 = vmatprep.subr.mxu0 0.0
    %2372 = vmatpush1.msra.mxu0 0.0
    %2373 = vmatprep.subr.mxu0 0.0
    %2374 = vmatpush1.msra.mxu0 0.0
    %2375 = vmatprep.mubr.f32.mxu0 0.0
    %v2376 = vand.u32 %v1932, 4294901760
    %v2377 = vsub.f32 %v1932, %v2376
    %v2378 = vand.u32 %v2377, 4294901760
    %2379 = vmatmul.mubr.f32.gmra.mrb[0].mxu0 %v2378
    %v2380 = vpop.f32.mrb[0].mxu0
    %v2381 = vadd.f32 %v2292, %v2380
    %v2382 = vpop.f32.mrb[0].mxu0
    %2383 = vdwg.mxu0
    %2384 = vmatprep.subr.mxu0 0.0
    %v2385 = vand.u32 %v1933, 4294901760
    %v2386 = vsub.f32 %v1933, %v2385
    %v2387 = vand.u32 %v2386, 4294901760
    %2388 = vmatpush1.msra.mxu0 %v2387
    %2389 = vmatprep.subr.mxu0 0.0
    %v2390 = vand.u32 %v1934, 4294901760
    %v2391 = vsub.f32 %v1934, %v2390
    %v2392 = vand.u32 %v2391, 4294901760
    %2393 = vmatpush1.msra.mxu0 %v2392
    %2394 = vmatprep.subr.mxu0 0.0
    %v2395 = vand.u32 %v1935, 4294901760
    %v2396 = vsub.f32 %v1935, %v2395
    %v2397 = vand.u32 %v2396, 4294901760
    %2398 = vmatpush1.msra.mxu0 %v2397
    %2399 = vmatprep.subr.mxu0 0.0
    %v2400 = vand.u32 %v1936, 4294901760
    %v2401 = vsub.f32 %v1936, %v2400
    %v2402 = vand.u32 %v2401, 4294901760
    %2403 = vmatpush1.msra.mxu0 %v2402
    %2404 = vmatprep.subr.mxu0 0.0
    %v2405 = vand.u32 %v1937, 4294901760
    %v2406 = vsub.f32 %v1937, %v2405
    %v2407 = vand.u32 %v2406, 4294901760
    %2408 = vmatpush1.msra.mxu0 %v2407
    %2409 = vmatprep.subr.mxu0 0.0
    %v2410 = vand.u32 %v1938, 4294901760
    %v2411 = vsub.f32 %v1938, %v2410
    %v2412 = vand.u32 %v2411, 4294901760
    %2413 = vmatpush1.msra.mxu0 %v2412
    %2414 = vmatprep.subr.mxu0 0.0
    %v2415 = vand.u32 %v1939, 4294901760
    %v2416 = vsub.f32 %v1939, %v2415
    %v2417 = vand.u32 %v2416, 4294901760
    %2418 = vmatpush1.msra.mxu0 %v2417
    %2419 = vmatprep.subr.mxu0 0.0
    %v2420 = vand.u32 %v1940, 4294901760
    %v2421 = vsub.f32 %v1940, %v2420
    %v2422 = vand.u32 %v2421, 4294901760
    %2423 = vmatpush1.msra.mxu0 %v2422
    %2424 = vmatprep.subr.mxu0 0.0
    %v2425 = vand.u32 %v1941, 4294901760
    %v2426 = vsub.f32 %v1941, %v2425
    %v2427 = vand.u32 %v2426, 4294901760
    %2428 = vmatpush1.msra.mxu0 %v2427
    %2429 = vmatprep.subr.mxu0 0.0
    %v2430 = vand.u32 %v1942, 4294901760
    %v2431 = vsub.f32 %v1942, %v2430
    %v2432 = vand.u32 %v2431, 4294901760
    %2433 = vmatpush1.msra.mxu0 %v2432
    %2434 = vmatprep.subr.mxu0 0.0
    %v2435 = vand.u32 %v1943, 4294901760
    %v2436 = vsub.f32 %v1943, %v2435
    %v2437 = vand.u32 %v2436, 4294901760
    %2438 = vmatpush1.msra.mxu0 %v2437
    %2439 = vmatprep.subr.mxu0 0.0
    %v2440 = vand.u32 %v1944, 4294901760
    %v2441 = vsub.f32 %v1944, %v2440
    %v2442 = vand.u32 %v2441, 4294901760
    %2443 = vmatpush1.msra.mxu0 %v2442
    %2444 = vmatprep.subr.mxu0 0.0
    %v2445 = vand.u32 %v1945, 4294901760
    %v2446 = vsub.f32 %v1945, %v2445
    %v2447 = vand.u32 %v2446, 4294901760
    %2448 = vmatpush1.msra.mxu0 %v2447
    %2449 = vmatprep.subr.mxu0 0.0
    %v2450 = vand.u32 %v1946, 4294901760
    %v2451 = vsub.f32 %v1946, %v2450
    %v2452 = vand.u32 %v2451, 4294901760
    %2453 = vmatpush1.msra.mxu0 %v2452
    %2454 = vmatprep.subr.mxu0 0.0
    %v2455 = vand.u32 %v1947, 4294901760
    %v2456 = vsub.f32 %v1947, %v2455
    %v2457 = vand.u32 %v2456, 4294901760
    %2458 = vmatpush1.msra.mxu0 %v2457
    %2459 = vmatprep.subr.mxu0 0.0
    %v2460 = vand.u32 %v1948, 4294901760
    %v2461 = vsub.f32 %v1948, %v2460
    %v2462 = vand.u32 %v2461, 4294901760
    %2463 = vmatpush1.msra.mxu0 %v2462
    %2464 = vmatprep.subr.mxu0 0.0
    %2465 = vmatpush1.msra.mxu0 0.0
    %2466 = vmatprep.subr.mxu0 0.0
    %2467 = vmatpush1.msra.mxu0 0.0
    %2468 = vmatprep.subr.mxu0 0.0
    %2469 = vmatpush1.msra.mxu0 0.0
    %2470 = vmatprep.subr.mxu0 0.0
    %2471 = vmatpush1.msra.mxu0 0.0
    %2472 = vmatprep.subr.mxu0 0.0
    %2473 = vmatpush1.msra.mxu0 0.0
    %2474 = vmatprep.subr.mxu0 0.0
    %2475 = vmatpush1.msra.mxu0 0.0
    %2476 = vmatprep.subr.mxu0 0.0
    %2477 = vmatpush1.msra.mxu0 0.0
    %2478 = vmatprep.subr.mxu0 0.0
    %2479 = vmatpush1.msra.mxu0 0.0
    %2480 = vmatprep.subr.mxu0 0.0
    %2481 = vmatpush1.msra.mxu0 0.0
    %2482 = vmatprep.subr.mxu0 0.0
    %2483 = vmatpush1.msra.mxu0 0.0
    %2484 = vmatprep.subr.mxu0 0.0
    %2485 = vmatpush1.msra.mxu0 0.0
    %2486 = vmatprep.subr.mxu0 0.0
    %2487 = vmatpush1.msra.mxu0 0.0
    %2488 = vmatprep.subr.mxu0 0.0
    %2489 = vmatpush1.msra.mxu0 0.0
    %2490 = vmatprep.subr.mxu0 0.0
    %2491 = vmatpush1.msra.mxu0 0.0
    %2492 = vmatprep.subr.mxu0 0.0
    %2493 = vmatpush1.msra.mxu0 0.0
    %2494 = vmatprep.subr.mxu0 0.0
    %2495 = vmatpush1.msra.mxu0 0.0
    %2496 = vmatprep.mubr.f32.mxu0 0.0
    %v2497 = vand.u32 %v1932, 4294901760
    %2498 = vmatmul.mubr.f32.gmra.mrb[0].mxu0 %v2497
    %v2499 = vpop.f32.mrb[0].mxu0
    %v2500 = vadd.f32 %v2381, %v2499
    %v2501 = vpop.f32.mrb[0].mxu0
    %2502 = vdwg.mxu0
    %2503 = vmatprep.subr.mxu0 0.0
    %v2504 = vand.u32 %v1933, 4294901760
    %2505 = vmatpush1.msra.mxu0 %v2504
    %2506 = vmatprep.subr.mxu0 0.0
    %v2507 = vand.u32 %v1934, 4294901760
    %2508 = vmatpush1.msra.mxu0 %v2507
    %2509 = vmatprep.subr.mxu0 0.0
    %v2510 = vand.u32 %v1935, 4294901760
    %2511 = vmatpush1.msra.mxu0 %v2510
    %2512 = vmatprep.subr.mxu0 0.0
    %v2513 = vand.u32 %v1936, 4294901760
    %2514 = vmatpush1.msra.mxu0 %v2513
    %2515 = vmatprep.subr.mxu0 0.0
    %v2516 = vand.u32 %v1937, 4294901760
    %2517 = vmatpush1.msra.mxu0 %v2516
    %2518 = vmatprep.subr.mxu0 0.0
    %v2519 = vand.u32 %v1938, 4294901760
    %2520 = vmatpush1.msra.mxu0 %v2519
    %2521 = vmatprep.subr.mxu0 0.0
    %v2522 = vand.u32 %v1939, 4294901760
    %2523 = vmatpush1.msra.mxu0 %v2522
    %2524 = vmatprep.subr.mxu0 0.0
    %v2525 = vand.u32 %v1940, 4294901760
    %2526 = vmatpush1.msra.mxu0 %v2525
    %2527 = vmatprep.subr.mxu0 0.0
    %v2528 = vand.u32 %v1941, 4294901760
    %2529 = vmatpush1.msra.mxu0 %v2528
    %2530 = vmatprep.subr.mxu0 0.0
    %v2531 = vand.u32 %v1942, 4294901760
    %2532 = vmatpush1.msra.mxu0 %v2531
    %2533 = vmatprep.subr.mxu0 0.0
    %v2534 = vand.u32 %v1943, 4294901760
    %2535 = vmatpush1.msra.mxu0 %v2534
    %2536 = vmatprep.subr.mxu0 0.0
    %v2537 = vand.u32 %v1944, 4294901760
    %2538 = vmatpush1.msra.mxu0 %v2537
    %2539 = vmatprep.subr.mxu0 0.0
    %v2540 = vand.u32 %v1945, 4294901760
    %2541 = vmatpush1.msra.mxu0 %v2540
    %2542 = vmatprep.subr.mxu0 0.0
    %v2543 = vand.u32 %v1946, 4294901760
    %2544 = vmatpush1.msra.mxu0 %v2543
    %2545 = vmatprep.subr.mxu0 0.0
    %v2546 = vand.u32 %v1947, 4294901760
    %2547 = vmatpush1.msra.mxu0 %v2546
    %2548 = vmatprep.subr.mxu0 0.0
    %v2549 = vand.u32 %v1948, 4294901760
    %2550 = vmatpush1.msra.mxu0 %v2549
    %2551 = vmatprep.subr.mxu0 0.0
    %2552 = vmatpush1.msra.mxu0 0.0
    %2553 = vmatprep.subr.mxu0 0.0
    %2554 = vmatpush1.msra.mxu0 0.0
    %2555 = vmatprep.subr.mxu0 0.0
    %2556 = vmatpush1.msra.mxu0 0.0
    %2557 = vmatprep.subr.mxu0 0.0
    %2558 = vmatpush1.msra.mxu0 0.0
    %2559 = vmatprep.subr.mxu0 0.0
    %2560 = vmatpush1.msra.mxu0 0.0
    %2561 = vmatprep.subr.mxu0 0.0
    %2562 = vmatpush1.msra.mxu0 0.0
    %2563 = vmatprep.subr.mxu0 0.0
    %2564 = vmatpush1.msra.mxu0 0.0
    %2565 = vmatprep.subr.mxu0 0.0
    %2566 = vmatpush1.msra.mxu0 0.0
    %2567 = vmatprep.subr.mxu0 0.0
    %2568 = vmatpush1.msra.mxu0 0.0
    %2569 = vmatprep.subr.mxu0 0.0
    %2570 = vmatpush1.msra.mxu0 0.0
    %2571 = vmatprep.subr.mxu0 0.0
    %2572 = vmatpush1.msra.mxu0 0.0
    %2573 = vmatprep.subr.mxu0 0.0
    %2574 = vmatpush1.msra.mxu0 0.0
    %2575 = vmatprep.subr.mxu0 0.0
    %2576 = vmatpush1.msra.mxu0 0.0
    %2577 = vmatprep.subr.mxu0 0.0
    %2578 = vmatpush1.msra.mxu0 0.0
    %2579 = vmatprep.subr.mxu0 0.0
    %2580 = vmatpush1.msra.mxu0 0.0
    %2581 = vmatprep.subr.mxu0 0.0
    %2582 = vmatpush1.msra.mxu0 0.0
    %2583 = vmatprep.mubr.f32.mxu0 0.0
    %v2584 = vand.u32 %v1932, 4294901760
    %2585 = vmatmul.mubr.f32.gmra.mrb[0].mxu0 %v2584
    %v2586 = vpop.f32.mrb[0].mxu0
    %v2587 = vadd.f32 %v2500, %v2586
    %v2588 = vpop.f32.mrb[0].mxu0
    %2589 = vdwg.mxu0
    %2590 = vst [vmem:[#allocation2] sm:$0xff] %v2587
    // Predicated region
    $region14: #{tpu_custom_call.1} parent=1 // pred_check
      _
    $region15: #{tpu_custom_call.1} parent=1 // pred_check_branch
      %2592 = sbr.rel (0) target = $region17
    $region16: #{tpu_custom_call.1} parent=1 // pred_region
      %s2594 = ssub.s32 128, 128
      %2595 = vsyncadd [#allocation3], %s2594
      %s2597 = sshll.u32 [#allocation2], 4
      %s2598 = int_to_ptr.vmem [resolvable:$true] %s2597
      %2600 = dma.vmem_to_hbm [thread:$0]  %s2598, 128, %s3, [#allocation3]
    $region17: #{tpu_custom_call.1} parent=1 // pred_fallthru
      _
    // Predicated region
    $region18: #{tpu_custom_call.1} parent=1 // pred_check
      _
    $region19: #{tpu_custom_call.1} parent=1 // pred_check_branch
      %2602 = sbr.rel (0) target = $region21
    $region20: #{tpu_custom_call.1} parent=1 // pred_region
      %2603 = dma.done [#allocation3], 128
    $region21: #{tpu_custom_call.1} parent=1 // pred_fallthru
      _
    %2604 = vsyncpa [#allocation3], 1

</llo_original>
